<compile_context>
chip_gen: v5e
topology: v5e:2x2
jax: 0.10.0
libtpu: 0.0.40
codegen_flags: <defaults>
</compile_context>

<pallas_src>
import jax
import jax.numpy as jnp
from jax.experimental import pallas as pl
from jax.experimental.pallas import tpu as pltpu

LANE = 128
SUBLANE = 8


def _round_up(n, m):
    return ((n + m - 1) // m) * m


# ---------------------------------------------------------------------------
# Kernel: 5 matmuls (bf16 inputs, f32 accum), f32 bias add, ReLU on 4 hidden layers.
# ---------------------------------------------------------------------------
def _mlp_kernel(x_ref,
                w1_ref, b1_ref,
                w2_ref, b2_ref,
                w3_ref, b3_ref,
                w4_ref, b4_ref,
                w5_ref, b5_ref,
                o_ref):
    def lin(h_f32, w_ref, b_ref, relu):
        # MXU: bf16 x bf16 -> f32 accumulation; VPU work (add/relu) stays f32.
        y = jnp.dot(h_f32.astype(jnp.bfloat16), w_ref[...],
                    preferred_element_type=jnp.float32) + b_ref[...]
        return jnp.maximum(y, 0.0) if relu else y

    h = x_ref[...]
    h = lin(h, w1_ref, b1_ref, True)
    h = lin(h, w2_ref, b2_ref, True)   # dropout -> identity (eval)
    h = lin(h, w3_ref, b3_ref, True)   # dropout -> identity (eval)
    h = lin(h, w4_ref, b4_ref, True)   # dropout -> identity (eval)
    o_ref[...] = lin(h, w5_ref, b5_ref, False).astype(o_ref.dtype)


# ---------------------------------------------------------------------------
# Wrapper: batch-tiled grid, resident weights, lane-padded feature/class dims.
# ---------------------------------------------------------------------------
def _choose_tile_b(B, tile_b):
    if B <= SUBLANE:
        return SUBLANE
    if B <= tile_b:
        # Split into 2 tiles so v7x's second TensorCore gets work.
        return max(SUBLANE, _round_up((B + 1) // 2, SUBLANE))
    return tile_b


def pytorch_classification_5_forward(x, folded_params, n_classes, *, tile_b=256):
    """x: (B, n_features) f32. folded_params: 10 arrays from fold_params()."""
    B, n_features = x.shape
    feat_padded = folded_params[0].shape[0]        # lane-padded input dim (multiple of 128)
    n_out_padded = folded_params[-1].shape[-1]     # lane-padded class dim (multiple of 128)

    if feat_padded != n_features:
        x = jnp.pad(x, ((0, 0), (0, feat_padded - n_features)))

    tb = _choose_tile_b(B, tile_b)
    Bp = _round_up(B, tb)
    if Bp != B:
        x = jnp.pad(x, ((0, Bp - B), (0, 0)))      # zero pad rows, sliced off below

    grid = (Bp // tb,)

    x_spec = pl.BlockSpec((tb, feat_padded), lambda i: (i, 0))
    out_spec = pl.BlockSpec((tb, n_out_padded), lambda i: (i, 0))
    # Weights/biases: full-shape block, constant index_map -> DMA'd once, resident in VMEM.
    w_specs = [pl.BlockSpec(p.shape, lambda i: (0, 0)) for p in folded_params]

    out = pl.pallas_call(
        _mlp_kernel,
        out_shape=jax.ShapeDtypeStruct((Bp, n_out_padded), jnp.float32),
        grid_spec=pltpu.PrefetchScalarGridSpec(
            num_scalar_prefetch=0,
            grid=grid,
            in_specs=[x_spec] + w_specs,
            out_specs=out_spec,
        ),
        compiler_params=pltpu.CompilerParams(
            dimension_semantics=("parallel",),     # shards batch tiles across both TCs on v7x
            vmem_limit_bytes=32 << 20,
        ),
    )(x, *folded_params)

    return out[:B, :n_classes]


# ---------------------------------------------------------------------------
# Parameter construction (PyTorch-equivalent raw params) + static BN folding.
# ---------------------------------------------------------------------------
def init_raw_params(key, n_features, n_classes):
    """Raw params matching the PyTorch module (eval mode, fresh running stats)."""
    dims = [n_features, 1024, 256, 128, 64, n_classes]
    keys = jax.random.split(key, 20)
    ki = 0
    hidden = []
    out = None
    for li in range(5):
        fan_in, fan_out = dims[li], dims[li + 1]
        bound = 1.0 / jnp.sqrt(jnp.float32(fan_in))
        # weight stored as (in, out): transpose of PyTorch's (out, in)
        w = jax.random.uniform(keys[ki], (fan_in, fan_out), jnp.float32, -bound, bound); ki += 1
        b = jax.random.uniform(keys[ki], (1, fan_out), jnp.float32, -bound, bound); ki += 1
        if li < 4:
            gamma = 1.0 + 0.1 * jax.random.normal(keys[ki], (1, fan_out), jnp.float32); ki += 1
            beta = 0.1 * jax.random.normal(keys[ki], (1, fan_out), jnp.float32); ki += 1
            running_mean = jnp.zeros((1, fan_out), jnp.float32)
            running_var = jnp.ones((1, fan_out), jnp.float32)
            hidden.append((w, b, gamma, beta, running_mean, running_var))
        else:
            out = (w, b)
    return {"hidden": tuple(hidden), "out": out}


def fold_params(raw, eps=1e-5):
    """Fold eval-mode BatchNorm into the Linears, lane-pad narrow dims, cast weights to bf16."""
    ws, bs = [], []
    for (w, b, gamma, beta, mean, var) in raw["hidden"]:
        scale = gamma / jnp.sqrt(var + eps)           # (1, fan_out)
        ws.append(w * scale)                          # W'
        bs.append((b - mean) * scale + beta)          # b'
    w5, b5 = raw["out"]
    ws.append(w5)
    bs.append(b5)

    folded = []
    for w, b in zip(ws, bs):
        fin, fout = w.shape
        fin_p, fout_p = _round_up(fin, LANE), _round_up(fout, LANE)
        # Zero padding keeps the math exact: padded input cols / hidden cols contribute 0.
        w = jnp.pad(w, ((0, fin_p - fin), (0, fout_p - fout)))
        b = jnp.pad(b, ((0, 0), (0, fout_p - fout)))
        folded.append(w.astype(jnp.bfloat16))         # MXU operand
        folded.append(b.astype(jnp.float32))          # f32 VPU add
    return tuple(folded)


def reference_forward(x, raw, eps=1e-5):
    """Plain-JAX f32 reference of the eval-mode forward (unfolded BN)."""
    h = x
    for (w, b, gamma, beta, mean, var) in raw["hidden"]:
        h = h @ w + b
        h = (h - mean) / jnp.sqrt(var + eps) * gamma + beta
        h = jnp.maximum(h, 0.0)
    w5, b5 = raw["out"]
    return h @ w5 + b5


def reference_forward_folded(x, folded):
    """Like-for-like reference: same folded bf16 params / f32 accumulation as the kernel."""
    feat_padded = folded[0].shape[0]
    h = jnp.pad(x, ((0, 0), (0, feat_padded - x.shape[1])))
    for li in range(5):
        w, b = folded[2 * li], folded[2 * li + 1]
        y = jnp.dot(h.astype(jnp.bfloat16), w, preferred_element_type=jnp.float32) + b
        h = jnp.maximum(y, 0.0) if li < 4 else y
    return h


if __name__ == "__main__":
    n_features, n_classes = 32, 10
    key = jax.random.PRNGKey(0)
    kx1, kx2, kp = jax.random.split(key, 3)

    raw = init_raw_params(kp, n_features, n_classes)
    params = fold_params(raw)

    fwd = jax.jit(pytorch_classification_5_forward, static_argnums=(2,))

    # Small batch (single grid step).
    x_small = jax.random.normal(kx1, (8, n_features), jnp.float32)
    out_small = jax.block_until_ready(fwd(x_small, params, n_classes))
    assert out_small.shape == (8, n_classes)
    ref_small_ff = reference_forward_folded(x_small, params)[:, :n_classes]
    ref_small_f32 = reference_forward(x_small, raw)
    assert jnp.allclose(out_small, ref_small_ff, atol=2e-2, rtol=2e-2), "mismatch (small, folded)"
    assert jnp.allclose(out_small, ref_small_f32, atol=5e-2, rtol=5e-2), "mismatch (small, f32)"

    # Batched case: exercises the 2-tile grid + tail padding + output slicing.
    x_big = jax.random.normal(kx2, (200, n_features), jnp.float32)
    out_big = jax.block_until_ready(fwd(x_big, params, n_classes))
    assert out_big.shape == (200, n_classes)
    ref_big_ff = reference_forward_folded(x_big, params)[:, :n_classes]
    ref_big_f32 = reference_forward(x_big, raw)
    assert jnp.allclose(out_big, ref_big_ff, atol=2e-2, rtol=2e-2), "mismatch (batched, folded)"
    assert jnp.allclose(out_big, ref_big_f32, atol=5e-2, rtol=5e-2), "mismatch (batched, f32)"

    print("KERNEL_OK")
</pallas_src>

<mosaic_0001>
module attributes {stable_mosaic.version = 11 : i64} {
  func.func @_mlp_kernel(%arg0: i32, %arg1: memref<8x128xf32, #tpu.memory_space<vmem>>, %arg2: memref<128x1024xbf16, #tpu.memory_space<vmem>>, %arg3: memref<1x1024xf32, #tpu.memory_space<vmem>>, %arg4: memref<1024x256xbf16, #tpu.memory_space<vmem>>, %arg5: memref<1x256xf32, #tpu.memory_space<vmem>>, %arg6: memref<256x128xbf16, #tpu.memory_space<vmem>>, %arg7: memref<1x128xf32, #tpu.memory_space<vmem>>, %arg8: memref<128x128xbf16, #tpu.memory_space<vmem>>, %arg9: memref<1x128xf32, #tpu.memory_space<vmem>>, %arg10: memref<128x128xbf16, #tpu.memory_space<vmem>>, %arg11: memref<1x128xf32, #tpu.memory_space<vmem>>, %arg12: memref<8x128xf32, #tpu.memory_space<vmem>>) attributes {dimension_semantics = [#tpu.dimension_semantics<parallel>], iteration_bounds = array<i64: 1>, scalar_prefetch = 0 : i64, scratch_operands = 0 : i64, tpu.core_type = #tpu.core_type<tc>, window_params = [{transform_indices = @transform_0, window_bounds = array<i64: 8, 128>}, {pipeline_mode = #tpu.pipeline_mode<synchronous>, transform_indices = @transform_1, window_bounds = array<i64: 128, 1024>}, {pipeline_mode = #tpu.pipeline_mode<synchronous>, transform_indices = @transform_2, window_bounds = array<i64: 1, 1024>}, {pipeline_mode = #tpu.pipeline_mode<synchronous>, transform_indices = @transform_3, window_bounds = array<i64: 1024, 256>}, {pipeline_mode = #tpu.pipeline_mode<synchronous>, transform_indices = @transform_4, window_bounds = array<i64: 1, 256>}, {pipeline_mode = #tpu.pipeline_mode<synchronous>, transform_indices = @transform_5, window_bounds = array<i64: 256, 128>}, {pipeline_mode = #tpu.pipeline_mode<synchronous>, transform_indices = @transform_6, window_bounds = array<i64: 1, 128>}, {pipeline_mode = #tpu.pipeline_mode<synchronous>, transform_indices = @transform_7, window_bounds = array<i64: 128, 128>}, {pipeline_mode = #tpu.pipeline_mode<synchronous>, transform_indices = @transform_8, window_bounds = array<i64: 1, 128>}, {pipeline_mode = #tpu.pipeline_mode<synchronous>, transform_indices = @transform_9, window_bounds = array<i64: 128, 128>}, {pipeline_mode = #tpu.pipeline_mode<synchronous>, transform_indices = @transform_10, window_bounds = array<i64: 1, 128>}, {transform_indices = @transform_11, window_bounds = array<i64: 8, 128>}]} {
    %c0 = arith.constant 0 : index
    %c0_0 = arith.constant 0 : index
    %0 = vector.load %arg1[%c0, %c0_0] : memref<8x128xf32, #tpu.memory_space<vmem>>, vector<8x128xf32>
    %1 = arith.truncf %0 : vector<8x128xf32> to vector<8x128xbf16>
    %c0_1 = arith.constant 0 : index
    %c0_2 = arith.constant 0 : index
    %2 = vector.load %arg2[%c0_1, %c0_2] : memref<128x1024xbf16, #tpu.memory_space<vmem>>, vector<128x1024xbf16>
    %cst = arith.constant dense<0.000000e+00> : vector<8x1024xf32>
    %3 = tpu.matmul %1, %2, %cst {dimension_numbers = #tpu.dot_dimension_numbers<[1], [0], [0], [1], [0, 0, 1, 1], [], []>} : vector<8x128xbf16>, vector<128x1024xbf16>, vector<8x1024xf32> -> vector<8x1024xf32>
    %c0_3 = arith.constant 0 : index
    %c0_4 = arith.constant 0 : index
    %4 = vector.load %arg3[%c0_3, %c0_4] : memref<1x1024xf32, #tpu.memory_space<vmem>>, vector<1x1024xf32>
    %5 = vector.broadcast %4 : vector<1x1024xf32> to vector<8x1024xf32>
    %6 = arith.addf %3, %5 : vector<8x1024xf32>
    %cst_5 = arith.constant 0.000000e+00 : f32
    %7 = vector.broadcast %cst_5 : f32 to vector<8x1024xf32>
    %8 = arith.maximumf %6, %7 : vector<8x1024xf32>
    %9 = arith.truncf %8 : vector<8x1024xf32> to vector<8x1024xbf16>
    %c0_6 = arith.constant 0 : index
    %c0_7 = arith.constant 0 : index
    %10 = vector.load %arg4[%c0_6, %c0_7] : memref<1024x256xbf16, #tpu.memory_space<vmem>>, vector<1024x256xbf16>
    %cst_8 = arith.constant dense<0.000000e+00> : vector<8x256xf32>
    %11 = tpu.matmul %9, %10, %cst_8 {dimension_numbers = #tpu.dot_dimension_numbers<[1], [0], [0], [1], [0, 0, 1, 1], [], []>} : vector<8x1024xbf16>, vector<1024x256xbf16>, vector<8x256xf32> -> vector<8x256xf32>
    %c0_9 = arith.constant 0 : index
    %c0_10 = arith.constant 0 : index
    %12 = vector.load %arg5[%c0_9, %c0_10] : memref<1x256xf32, #tpu.memory_space<vmem>>, vector<1x256xf32>
    %13 = vector.broadcast %12 : vector<1x256xf32> to vector<8x256xf32>
    %14 = arith.addf %11, %13 : vector<8x256xf32>
    %cst_11 = arith.constant 0.000000e+00 : f32
    %15 = vector.broadcast %cst_11 : f32 to vector<8x256xf32>
    %16 = arith.maximumf %14, %15 : vector<8x256xf32>
    %17 = arith.truncf %16 : vector<8x256xf32> to vector<8x256xbf16>
    %c0_12 = arith.constant 0 : index
    %c0_13 = arith.constant 0 : index
    %18 = vector.load %arg6[%c0_12, %c0_13] : memref<256x128xbf16, #tpu.memory_space<vmem>>, vector<256x128xbf16>
    %cst_14 = arith.constant dense<0.000000e+00> : vector<8x128xf32>
    %19 = tpu.matmul %17, %18, %cst_14 {dimension_numbers = #tpu.dot_dimension_numbers<[1], [0], [0], [1], [0, 0, 1, 1], [], []>} : vector<8x256xbf16>, vector<256x128xbf16>, vector<8x128xf32> -> vector<8x128xf32>
    %c0_15 = arith.constant 0 : index
    %c0_16 = arith.constant 0 : index
    %20 = vector.load %arg7[%c0_15, %c0_16] : memref<1x128xf32, #tpu.memory_space<vmem>>, vector<1x128xf32>
    %21 = vector.broadcast %20 : vector<1x128xf32> to vector<8x128xf32>
    %22 = arith.addf %19, %21 : vector<8x128xf32>
    %cst_17 = arith.constant 0.000000e+00 : f32
    %23 = vector.broadcast %cst_17 : f32 to vector<8x128xf32>
    %24 = arith.maximumf %22, %23 : vector<8x128xf32>
    %25 = arith.truncf %24 : vector<8x128xf32> to vector<8x128xbf16>
    %c0_18 = arith.constant 0 : index
    %c0_19 = arith.constant 0 : index
    %26 = vector.load %arg8[%c0_18, %c0_19] : memref<128x128xbf16, #tpu.memory_space<vmem>>, vector<128x128xbf16>
    %cst_20 = arith.constant dense<0.000000e+00> : vector<8x128xf32>
    %27 = tpu.matmul %25, %26, %cst_20 {dimension_numbers = #tpu.dot_dimension_numbers<[1], [0], [0], [1], [0, 0, 1, 1], [], []>} : vector<8x128xbf16>, vector<128x128xbf16>, vector<8x128xf32> -> vector<8x128xf32>
    %c0_21 = arith.constant 0 : index
    %c0_22 = arith.constant 0 : index
    %28 = vector.load %arg9[%c0_21, %c0_22] : memref<1x128xf32, #tpu.memory_space<vmem>>, vector<1x128xf32>
    %29 = vector.broadcast %28 : vector<1x128xf32> to vector<8x128xf32>
    %30 = arith.addf %27, %29 : vector<8x128xf32>
    %cst_23 = arith.constant 0.000000e+00 : f32
    %31 = vector.broadcast %cst_23 : f32 to vector<8x128xf32>
    %32 = arith.maximumf %30, %31 : vector<8x128xf32>
    %33 = arith.truncf %32 : vector<8x128xf32> to vector<8x128xbf16>
    %c0_24 = arith.constant 0 : index
    %c0_25 = arith.constant 0 : index
    %34 = vector.load %arg10[%c0_24, %c0_25] : memref<128x128xbf16, #tpu.memory_space<vmem>>, vector<128x128xbf16>
    %cst_26 = arith.constant dense<0.000000e+00> : vector<8x128xf32>
    %35 = tpu.matmul %33, %34, %cst_26 {dimension_numbers = #tpu.dot_dimension_numbers<[1], [0], [0], [1], [0, 0, 1, 1], [], []>} : vector<8x128xbf16>, vector<128x128xbf16>, vector<8x128xf32> -> vector<8x128xf32>
    %c0_27 = arith.constant 0 : index
    %c0_28 = arith.constant 0 : index
    %36 = vector.load %arg11[%c0_27, %c0_28] : memref<1x128xf32, #tpu.memory_space<vmem>>, vector<1x128xf32>
    %37 = vector.broadcast %36 : vector<1x128xf32> to vector<8x128xf32>
    %38 = arith.addf %35, %37 : vector<8x128xf32>
    %c0_29 = arith.constant 0 : index
    %c0_30 = arith.constant 0 : index
    %39 = vector.load %arg12[%c0_29, %c0_30] : memref<8x128xf32, #tpu.memory_space<vmem>>, vector<8x128xf32>
    tpu.vector_store %arg12[%c0_29, %c0_30], %38 {strides = array<i32>} : memref<8x128xf32, #tpu.memory_space<vmem>>, vector<8x128xf32>,
    return
  }
  func.func @transform_0(%arg0: i32) -> (i32, i32) {
    %c0_i32 = arith.constant 0 : i32
    %c0_i32_0 = arith.constant 0 : i32
    return %arg0, %c0_i32 : i32, i32
  }
  func.func @transform_1(%arg0: i32) -> (i32, i32) {
    %c0_i32 = arith.constant 0 : i32
    %c0_i32_0 = arith.constant 0 : i32
    %c0_i32_1 = arith.constant 0 : i32
    return %c0_i32, %c0_i32_0 : i32, i32
  }
  func.func @transform_2(%arg0: i32) -> (i32, i32) {
    %c0_i32 = arith.constant 0 : i32
    %c0_i32_0 = arith.constant 0 : i32
    %c0_i32_1 = arith.constant 0 : i32
    return %c0_i32, %c0_i32_0 : i32, i32
  }
  func.func @transform_3(%arg0: i32) -> (i32, i32) {
    %c0_i32 = arith.constant 0 : i32
    %c0_i32_0 = arith.constant 0 : i32
    %c0_i32_1 = arith.constant 0 : i32
    return %c0_i32, %c0_i32_0 : i32, i32
  }
  func.func @transform_4(%arg0: i32) -> (i32, i32) {
    %c0_i32 = arith.constant 0 : i32
    %c0_i32_0 = arith.constant 0 : i32
    %c0_i32_1 = arith.constant 0 : i32
    return %c0_i32, %c0_i32_0 : i32, i32
  }
  func.func @transform_5(%arg0: i32) -> (i32, i32) {
    %c0_i32 = arith.constant 0 : i32
    %c0_i32_0 = arith.constant 0 : i32
    %c0_i32_1 = arith.constant 0 : i32
    return %c0_i32, %c0_i32_0 : i32, i32
  }
  func.func @transform_6(%arg0: i32) -> (i32, i32) {
    %c0_i32 = arith.constant 0 : i32
    %c0_i32_0 = arith.constant 0 : i32
    %c0_i32_1 = arith.constant 0 : i32
    return %c0_i32, %c0_i32_0 : i32, i32
  }
  func.func @transform_7(%arg0: i32) -> (i32, i32) {
    %c0_i32 = arith.constant 0 : i32
    %c0_i32_0 = arith.constant 0 : i32
    %c0_i32_1 = arith.constant 0 : i32
    return %c0_i32, %c0_i32_0 : i32, i32
  }
  func.func @transform_8(%arg0: i32) -> (i32, i32) {
    %c0_i32 = arith.constant 0 : i32
    %c0_i32_0 = arith.constant 0 : i32
    %c0_i32_1 = arith.constant 0 : i32
    return %c0_i32, %c0_i32_0 : i32, i32
  }
  func.func @transform_9(%arg0: i32) -> (i32, i32) {
    %c0_i32 = arith.constant 0 : i32
    %c0_i32_0 = arith.constant 0 : i32
    %c0_i32_1 = arith.constant 0 : i32
    return %c0_i32, %c0_i32_0 : i32, i32
  }
  func.func @transform_10(%arg0: i32) -> (i32, i32) {
    %c0_i32 = arith.constant 0 : i32
    %c0_i32_0 = arith.constant 0 : i32
    %c0_i32_1 = arith.constant 0 : i32
    return %c0_i32, %c0_i32_0 : i32, i32
  }
  func.func @transform_11(%arg0: i32) -> (i32, i32) {
    %c0_i32 = arith.constant 0 : i32
    %c0_i32_0 = arith.constant 0 : i32
    return %arg0, %c0_i32 : i32, i32
  }
}

</mosaic_0001>

<llo_original>
// kernel: pytorch_classification_5_forward.1
$region0: #{pytorch_classification_5_forward.1}
  #allocation0 [shape = 'u32[]', space=smem, size = 0x4, offset = 0x4, fixed_abs, tag = 'smem constant byte address 0x4 - core index']
  #allocation1 [shape = 'u32[72,128]{1,0:T(1,128)}', space=vmem, size = 0x9000, scoped, tag = 'internal scratch']
  %s0 = inlined_call_operand.vmem [shape: f32[8,128], index: 0, kind: input, shape index: {}]
  %s1 = inlined_call_operand.hbm [shape: bf16[128,1024], index: 1, kind: input, shape index: {}]
  %s2 = inlined_call_operand.vmem [shape: f32[1,1024], index: 2, kind: input, shape index: {}]
  %s3 = inlined_call_operand.hbm [shape: bf16[1024,256], index: 3, kind: input, shape index: {}]
  %s4 = inlined_call_operand.vmem [shape: f32[1,256], index: 4, kind: input, shape index: {}]
  %s5 = inlined_call_operand.hbm [shape: bf16[256,128], index: 5, kind: input, shape index: {}]
  %s6 = inlined_call_operand.vmem [shape: f32[1,128], index: 6, kind: input, shape index: {}]
  %s7 = inlined_call_operand.hbm [shape: bf16[128,128], index: 7, kind: input, shape index: {}]
  %s8 = inlined_call_operand.vmem [shape: f32[1,128], index: 8, kind: input, shape index: {}]
  %s9 = inlined_call_operand.hbm [shape: bf16[128,128], index: 9, kind: input, shape index: {}]
  %s10 = inlined_call_operand.vmem [shape: f32[1,128], index: 10, kind: input, shape index: {}]
  %s11 = inlined_call_operand.hbm [shape: f32[8,128], index: 11, kind: output, shape index: {}]
  %s12 = sld [smem:[#allocation0]]
  $region74: #{pytorch_classification_5_forward.1} parent=0
    _
  %s14 = ssub.s32 1, %s12
  %s15 = scalar_select 0, %s14, %s12
  $region1: #{pytorch_classification_5_forward.1} parent=0
    #allocation2 [shape = 'u8[262144]{0}', space=vmem, size = 0x40000, scoped, tag = 'input window, operand 1, single buffered']
    #allocation3 [shape = 's32[1]{0}', space=sflag, size = 0x4, scoped, tag = 'scoped memory for pytorch_classification_5_forward.1']
    #allocation4 [shape = 's32[1]{0}', space=sflag, size = 0x4, scoped, tag = 'scoped memory for pytorch_classification_5_forward.1']
    #allocation5 [shape = 'u8[524288]{0}', space=vmem, size = 0x80000, scoped, tag = 'input window, operand 3, single buffered']
    #allocation6 [shape = 's32[1]{0}', space=sflag, size = 0x4, scoped, tag = 'scoped memory for pytorch_classification_5_forward.1']
    #allocation7 [shape = 'u8[65536]{0}', space=vmem, size = 0x10000, scoped, tag = 'input window, operand 5, single buffered']
    #allocation8 [shape = 'u8[32768]{0}', space=vmem, size = 0x8000, scoped, tag = 'input window, operand 7, single buffered']
    #allocation9 [shape = 's32[1]{0}', space=sflag, size = 0x4, scoped, tag = 'scoped memory for pytorch_classification_5_forward.1']
    #allocation10 [shape = 'u8[32768]{0}', space=vmem, size = 0x8000, scoped, tag = 'input window, operand 9, single buffered']
    #allocation11 [shape = 'u8[4096]{0}', space=vmem, size = 0x1000, scoped, tag = 'output window, operand 0, single buffered']
    %16 = vsyncpa [#allocation3], 0
    %17 = vsyncpa [#allocation6], 0
    %18 = vsyncpa [#allocation9], 0
    %19 = vsyncpa [#allocation4], 0
    // Predicated region
    $region2: #{pytorch_classification_5_forward.1} parent=1 // pred_check
      _
    $region3: #{pytorch_classification_5_forward.1} parent=1 // pred_check_branch
      %21 = sbr.rel (0) target = $region5
    $region4: #{pytorch_classification_5_forward.1} parent=1 // pred_region
      _
    $region5: #{pytorch_classification_5_forward.1} parent=1 // pred_fallthru
      _
    // Predicated region
    $region6: #{pytorch_classification_5_forward.1} parent=1 // pred_check
      _
    $region7: #{pytorch_classification_5_forward.1} parent=1 // pred_check_branch
      %23 = sbr.rel (0) target = $region9
    $region8: #{pytorch_classification_5_forward.1} parent=1 // pred_region
      %25 = vsyncadd [#allocation3], 0
      %s26 = sshll.u32 %s1, 4
      %s27 = int_to_ptr.hbm [resolvable:$true] %s26
      %s28 = sshll.u32 [#allocation2], 4
      %s29 = int_to_ptr.vmem [resolvable:$true] %s28
      %34 = dma.hbm_to_vmem [thread:$0]  %s27, 8192, %s29, [#allocation3], 512, 512, 32
    $region9: #{pytorch_classification_5_forward.1} parent=1 // pred_fallthru
      _
    // Predicated region
    $region10: #{pytorch_classification_5_forward.1} parent=1 // pred_check
      _
    $region11: #{pytorch_classification_5_forward.1} parent=1 // pred_check_branch
      %36 = sbr.rel (0) target = $region13
    $region12: #{pytorch_classification_5_forward.1} parent=1 // pred_region
      _
    $region13: #{pytorch_classification_5_forward.1} parent=1 // pred_fallthru
      _
    // Predicated region
    $region14: #{pytorch_classification_5_forward.1} parent=1 // pred_check
      _
    $region15: #{pytorch_classification_5_forward.1} parent=1 // pred_check_branch
      %38 = sbr.rel (0) target = $region17
    $region16: #{pytorch_classification_5_forward.1} parent=1 // pred_region
      %40 = vsyncadd [#allocation6], 0
      %s41 = sshll.u32 %s3, 4
      %s42 = int_to_ptr.hbm [resolvable:$true] %s41
      %s43 = sshll.u32 [#allocation5], 4
      %s44 = int_to_ptr.vmem [resolvable:$true] %s43
      %49 = dma.hbm_to_vmem [thread:$0]  %s42, 16384, %s44, [#allocation6], 128, 128, 8
    $region17: #{pytorch_classification_5_forward.1} parent=1 // pred_fallthru
      _
    // Predicated region
    $region18: #{pytorch_classification_5_forward.1} parent=1 // pred_check
      _
    $region19: #{pytorch_classification_5_forward.1} parent=1 // pred_check_branch
      %51 = sbr.rel (0) target = $region21
    $region20: #{pytorch_classification_5_forward.1} parent=1 // pred_region
      _
    $region21: #{pytorch_classification_5_forward.1} parent=1 // pred_fallthru
      _
    // Predicated region
    $region22: #{pytorch_classification_5_forward.1} parent=1 // pred_check
      _
    $region23: #{pytorch_classification_5_forward.1} parent=1 // pred_check_branch
      %53 = sbr.rel (0) target = $region25
    $region24: #{pytorch_classification_5_forward.1} parent=1 // pred_region
      %55 = vsyncadd [#allocation6], 0
      %s56 = sshll.u32 %s5, 4
      %s57 = int_to_ptr.hbm [resolvable:$true] %s56
      %s58 = sshll.u32 [#allocation7], 4
      %s59 = int_to_ptr.vmem [resolvable:$true] %s58
      %64 = dma.hbm_to_vmem [thread:$0]  %s57, 2048, %s59, [#allocation6], 64, 64, 4
    $region25: #{pytorch_classification_5_forward.1} parent=1 // pred_fallthru
      _
    // Predicated region
    $region26: #{pytorch_classification_5_forward.1} parent=1 // pred_check
      _
    $region27: #{pytorch_classification_5_forward.1} parent=1 // pred_check_branch
      %66 = sbr.rel (0) target = $region29
    $region28: #{pytorch_classification_5_forward.1} parent=1 // pred_region
      _
    $region29: #{pytorch_classification_5_forward.1} parent=1 // pred_fallthru
      _
    // Predicated region
    $region30: #{pytorch_classification_5_forward.1} parent=1 // pred_check
      _
    $region31: #{pytorch_classification_5_forward.1} parent=1 // pred_check_branch
      %68 = sbr.rel (0) target = $region33
    $region32: #{pytorch_classification_5_forward.1} parent=1 // pred_region
      %70 = vsyncadd [#allocation9], 0
      %s71 = sshll.u32 %s7, 4
      %s72 = int_to_ptr.hbm [resolvable:$true] %s71
      %s73 = sshll.u32 [#allocation8], 4
      %s74 = int_to_ptr.vmem [resolvable:$true] %s73
      %79 = dma.hbm_to_vmem [thread:$0]  %s72, 1024, %s74, [#allocation9], 64, 64, 4
    $region33: #{pytorch_classification_5_forward.1} parent=1 // pred_fallthru
      _
    // Predicated region
    $region34: #{pytorch_classification_5_forward.1} parent=1 // pred_check
      _
    $region35: #{pytorch_classification_5_forward.1} parent=1 // pred_check_branch
      %81 = sbr.rel (0) target = $region37
    $region36: #{pytorch_classification_5_forward.1} parent=1 // pred_region
      _
    $region37: #{pytorch_classification_5_forward.1} parent=1 // pred_fallthru
      _
    // Predicated region
    $region38: #{pytorch_classification_5_forward.1} parent=1 // pred_check
      _
    $region39: #{pytorch_classification_5_forward.1} parent=1 // pred_check_branch
      %83 = sbr.rel (0) target = $region41
    $region40: #{pytorch_classification_5_forward.1} parent=1 // pred_region
      %85 = vsyncadd [#allocation9], 0
      %s86 = sshll.u32 %s9, 4
      %s87 = int_to_ptr.hbm [resolvable:$true] %s86
      %s88 = sshll.u32 [#allocation10], 4
      %s89 = int_to_ptr.vmem [resolvable:$true] %s88
      %94 = dma.hbm_to_vmem [thread:$0]  %s87, 1024, %s89, [#allocation9], 64, 64, 4
    $region41: #{pytorch_classification_5_forward.1} parent=1 // pred_fallthru
      _
    // Predicated region
    $region42: #{pytorch_classification_5_forward.1} parent=1 // pred_check
      _
    $region43: #{pytorch_classification_5_forward.1} parent=1 // pred_check_branch
      %96 = sbr.rel (0) target = $region45
    $region44: #{pytorch_classification_5_forward.1} parent=1 // pred_region
      _
    $region45: #{pytorch_classification_5_forward.1} parent=1 // pred_fallthru
      _
    // Predicated region
    $region46: #{pytorch_classification_5_forward.1} parent=1 // pred_check
      _
    $region47: #{pytorch_classification_5_forward.1} parent=1 // pred_check_branch
      %98 = sbr.rel (0) target = $region49
    $region48: #{pytorch_classification_5_forward.1} parent=1 // pred_region
      %100 = dma.done [#allocation3], 8192
    $region49: #{pytorch_classification_5_forward.1} parent=1 // pred_fallthru
      _
    // Predicated region
    $region50: #{pytorch_classification_5_forward.1} parent=1 // pred_check
      _
    $region51: #{pytorch_classification_5_forward.1} parent=1 // pred_check_branch
      %102 = sbr.rel (0) target = $region53
    $region52: #{pytorch_classification_5_forward.1} parent=1 // pred_region
      %104 = dma.done [#allocation6], 16384
    $region53: #{pytorch_classification_5_forward.1} parent=1 // pred_fallthru
      _
    // Predicated region
    $region54: #{pytorch_classification_5_forward.1} parent=1 // pred_check
      _
    $region55: #{pytorch_classification_5_forward.1} parent=1 // pred_check_branch
      %106 = sbr.rel (0) target = $region57
    $region56: #{pytorch_classification_5_forward.1} parent=1 // pred_region
      %108 = dma.done [#allocation6], 2048
    $region57: #{pytorch_classification_5_forward.1} parent=1 // pred_fallthru
      _
    // Predicated region
    $region58: #{pytorch_classification_5_forward.1} parent=1 // pred_check
      _
    $region59: #{pytorch_classification_5_forward.1} parent=1 // pred_check_branch
      %110 = sbr.rel (0) target = $region61
    $region60: #{pytorch_classification_5_forward.1} parent=1 // pred_region
      %112 = dma.done [#allocation9], 1024
    $region61: #{pytorch_classification_5_forward.1} parent=1 // pred_fallthru
      _
    // Predicated region
    $region62: #{pytorch_classification_5_forward.1} parent=1 // pred_check
      _
    $region63: #{pytorch_classification_5_forward.1} parent=1 // pred_check_branch
      %114 = sbr.rel (0) target = $region65
    $region64: #{pytorch_classification_5_forward.1} parent=1 // pred_region
      %116 = dma.done [#allocation9], 1024
    $region65: #{pytorch_classification_5_forward.1} parent=1 // pred_fallthru
      _
    %v117 = vld [vmem:[%s0] sm:$0xff]
    %v118 = vpack.c.bf16 %v117, %v117
    %v119 = vld [vmem:[#allocation2] sm:$0xff]
    %v120 = vld [vmem:[#allocation2 + $0x8] sm:$0xff]
    %v121 = vld [vmem:[#allocation2 + $0x10] sm:$0xff]
    %v122 = vld [vmem:[#allocation2 + $0x18] sm:$0xff]
    %v123 = vld [vmem:[#allocation2 + $0x20] sm:$0xff]
    %v124 = vld [vmem:[#allocation2 + $0x28] sm:$0xff]
    %v125 = vld [vmem:[#allocation2 + $0x30] sm:$0xff]
    %v126 = vld [vmem:[#allocation2 + $0x38] sm:$0xff]
    %v127 = vld [vmem:[#allocation2 + $0x40] sm:$0xff]
    %v128 = vld [vmem:[#allocation2 + $0x48] sm:$0xff]
    %v129 = vld [vmem:[#allocation2 + $0x50] sm:$0xff]
    %v130 = vld [vmem:[#allocation2 + $0x58] sm:$0xff]
    %v131 = vld [vmem:[#allocation2 + $0x60] sm:$0xff]
    %v132 = vld [vmem:[#allocation2 + $0x68] sm:$0xff]
    %v133 = vld [vmem:[#allocation2 + $0x70] sm:$0xff]
    %v134 = vld [vmem:[#allocation2 + $0x78] sm:$0xff]
    %v135 = vld [vmem:[#allocation2 + $0x80] sm:$0xff]
    %v136 = vld [vmem:[#allocation2 + $0x88] sm:$0xff]
    %v137 = vld [vmem:[#allocation2 + $0x90] sm:$0xff]
    %v138 = vld [vmem:[#allocation2 + $0x98] sm:$0xff]
    %v139 = vld [vmem:[#allocation2 + $0xa0] sm:$0xff]
    %v140 = vld [vmem:[#allocation2 + $0xa8] sm:$0xff]
    %v141 = vld [vmem:[#allocation2 + $0xb0] sm:$0xff]
    %v142 = vld [vmem:[#allocation2 + $0xb8] sm:$0xff]
    %v143 = vld [vmem:[#allocation2 + $0xc0] sm:$0xff]
    %v144 = vld [vmem:[#allocation2 + $0xc8] sm:$0xff]
    %v145 = vld [vmem:[#allocation2 + $0xd0] sm:$0xff]
    %v146 = vld [vmem:[#allocation2 + $0xd8] sm:$0xff]
    %v147 = vld [vmem:[#allocation2 + $0xe0] sm:$0xff]
    %v148 = vld [vmem:[#allocation2 + $0xe8] sm:$0xff]
    %v149 = vld [vmem:[#allocation2 + $0xf0] sm:$0xff]
    %v150 = vld [vmem:[#allocation2 + $0xf8] sm:$0xff]
    %v151 = vld [vmem:[#allocation2 + $0x100] sm:$0xff]
    %v152 = vld [vmem:[#allocation2 + $0x108] sm:$0xff]
    %v153 = vld [vmem:[#allocation2 + $0x110] sm:$0xff]
    %v154 = vld [vmem:[#allocation2 + $0x118] sm:$0xff]
    %v155 = vld [vmem:[#allocation2 + $0x120] sm:$0xff]
    %v156 = vld [vmem:[#allocation2 + $0x128] sm:$0xff]
    %v157 = vld [vmem:[#allocation2 + $0x130] sm:$0xff]
    %v158 = vld [vmem:[#allocation2 + $0x138] sm:$0xff]
    %v159 = vld [vmem:[#allocation2 + $0x140] sm:$0xff]
    %v160 = vld [vmem:[#allocation2 + $0x148] sm:$0xff]
    %v161 = vld [vmem:[#allocation2 + $0x150] sm:$0xff]
    %v162 = vld [vmem:[#allocation2 + $0x158] sm:$0xff]
    %v163 = vld [vmem:[#allocation2 + $0x160] sm:$0xff]
    %v164 = vld [vmem:[#allocation2 + $0x168] sm:$0xff]
    %v165 = vld [vmem:[#allocation2 + $0x170] sm:$0xff]
    %v166 = vld [vmem:[#allocation2 + $0x178] sm:$0xff]
    %v167 = vld [vmem:[#allocation2 + $0x180] sm:$0xff]
    %v168 = vld [vmem:[#allocation2 + $0x188] sm:$0xff]
    %v169 = vld [vmem:[#allocation2 + $0x190] sm:$0xff]
    %v170 = vld [vmem:[#allocation2 + $0x198] sm:$0xff]
    %v171 = vld [vmem:[#allocation2 + $0x1a0] sm:$0xff]
    %v172 = vld [vmem:[#allocation2 + $0x1a8] sm:$0xff]
    %v173 = vld [vmem:[#allocation2 + $0x1b0] sm:$0xff]
    %v174 = vld [vmem:[#allocation2 + $0x1b8] sm:$0xff]
    %v175 = vld [vmem:[#allocation2 + $0x1c0] sm:$0xff]
    %v176 = vld [vmem:[#allocation2 + $0x1c8] sm:$0xff]
    %v177 = vld [vmem:[#allocation2 + $0x1d0] sm:$0xff]
    %v178 = vld [vmem:[#allocation2 + $0x1d8] sm:$0xff]
    %v179 = vld [vmem:[#allocation2 + $0x1e0] sm:$0xff]
    %v180 = vld [vmem:[#allocation2 + $0x1e8] sm:$0xff]
    %v181 = vld [vmem:[#allocation2 + $0x1f0] sm:$0xff]
    %v182 = vld [vmem:[#allocation2 + $0x1f8] sm:$0xff]
    %v183 = vld [vmem:[%s2] sm:$0xff]
    %v185 = vperm.slane %v183, 0
    %v186 = vperm.slane %v183, 1
    %v187 = vperm.slane %v183, 2
    %v188 = vperm.slane %v183, 3
    %v189 = vperm.slane %v183, 4
    %v190 = vperm.slane %v183, 5
    %v191 = vperm.slane %v183, 6
    %v192 = vperm.slane %v183, 7
    %v265 = vunpack.c.l.b16 %v119
    %v266 = vunpack.c.h.b16 %v119
    %v267 = vunpack.c.l.b16 %v120
    %v268 = vunpack.c.h.b16 %v120
    %v269 = vunpack.c.l.b16 %v121
    %v270 = vunpack.c.h.b16 %v121
    %v271 = vunpack.c.l.b16 %v122
    %v272 = vunpack.c.h.b16 %v122
    %v273 = vunpack.c.l.b16 %v123
    %v274 = vunpack.c.h.b16 %v123
    %v275 = vunpack.c.l.b16 %v124
    %v276 = vunpack.c.h.b16 %v124
    %v277 = vunpack.c.l.b16 %v125
    %v278 = vunpack.c.h.b16 %v125
    %v279 = vunpack.c.l.b16 %v126
    %v280 = vunpack.c.h.b16 %v126
    %v281 = vunpack.c.l.b16 %v127
    %v282 = vunpack.c.h.b16 %v127
    %v283 = vunpack.c.l.b16 %v128
    %v284 = vunpack.c.h.b16 %v128
    %v285 = vunpack.c.l.b16 %v129
    %v286 = vunpack.c.h.b16 %v129
    %v287 = vunpack.c.l.b16 %v130
    %v288 = vunpack.c.h.b16 %v130
    %v289 = vunpack.c.l.b16 %v131
    %v290 = vunpack.c.h.b16 %v131
    %v291 = vunpack.c.l.b16 %v132
    %v292 = vunpack.c.h.b16 %v132
    %v293 = vunpack.c.l.b16 %v133
    %v294 = vunpack.c.h.b16 %v133
    %v295 = vunpack.c.l.b16 %v134
    %v296 = vunpack.c.h.b16 %v134
    %v297 = vunpack.c.l.b16 %v135
    %v298 = vunpack.c.h.b16 %v135
    %v299 = vunpack.c.l.b16 %v136
    %v300 = vunpack.c.h.b16 %v136
    %v301 = vunpack.c.l.b16 %v137
    %v302 = vunpack.c.h.b16 %v137
    %v303 = vunpack.c.l.b16 %v138
    %v304 = vunpack.c.h.b16 %v138
    %v305 = vunpack.c.l.b16 %v139
    %v306 = vunpack.c.h.b16 %v139
    %v307 = vunpack.c.l.b16 %v140
    %v308 = vunpack.c.h.b16 %v140
    %v309 = vunpack.c.l.b16 %v141
    %v310 = vunpack.c.h.b16 %v141
    %v311 = vunpack.c.l.b16 %v142
    %v312 = vunpack.c.h.b16 %v142
    %v313 = vunpack.c.l.b16 %v143
    %v314 = vunpack.c.h.b16 %v143
    %v315 = vunpack.c.l.b16 %v144
    %v316 = vunpack.c.h.b16 %v144
    %v317 = vunpack.c.l.b16 %v145
    %v318 = vunpack.c.h.b16 %v145
    %v319 = vunpack.c.l.b16 %v146
    %v320 = vunpack.c.h.b16 %v146
    %v321 = vunpack.c.l.b16 %v147
    %v322 = vunpack.c.h.b16 %v147
    %v323 = vunpack.c.l.b16 %v148
    %v324 = vunpack.c.h.b16 %v148
    %v325 = vunpack.c.l.b16 %v149
    %v326 = vunpack.c.h.b16 %v149
    %v327 = vunpack.c.l.b16 %v150
    %v328 = vunpack.c.h.b16 %v150
    %v329 = vunpack.c.l.b16 %v151
    %v330 = vunpack.c.h.b16 %v151
    %v331 = vunpack.c.l.b16 %v152
    %v332 = vunpack.c.h.b16 %v152
    %v333 = vunpack.c.l.b16 %v153
    %v334 = vunpack.c.h.b16 %v153
    %v335 = vunpack.c.l.b16 %v154
    %v336 = vunpack.c.h.b16 %v154
    %v337 = vunpack.c.l.b16 %v155
    %v338 = vunpack.c.h.b16 %v155
    %v339 = vunpack.c.l.b16 %v156
    %v340 = vunpack.c.h.b16 %v156
    %v341 = vunpack.c.l.b16 %v157
    %v342 = vunpack.c.h.b16 %v157
    %v343 = vunpack.c.l.b16 %v158
    %v344 = vunpack.c.h.b16 %v158
    %v345 = vunpack.c.l.b16 %v159
    %v346 = vunpack.c.h.b16 %v159
    %v347 = vunpack.c.l.b16 %v160
    %v348 = vunpack.c.h.b16 %v160
    %v349 = vunpack.c.l.b16 %v161
    %v350 = vunpack.c.h.b16 %v161
    %v351 = vunpack.c.l.b16 %v162
    %v352 = vunpack.c.h.b16 %v162
    %v353 = vunpack.c.l.b16 %v163
    %v354 = vunpack.c.h.b16 %v163
    %v355 = vunpack.c.l.b16 %v164
    %v356 = vunpack.c.h.b16 %v164
    %v357 = vunpack.c.l.b16 %v165
    %v358 = vunpack.c.h.b16 %v165
    %v359 = vunpack.c.l.b16 %v166
    %v360 = vunpack.c.h.b16 %v166
    %v361 = vunpack.c.l.b16 %v167
    %v362 = vunpack.c.h.b16 %v167
    %v363 = vunpack.c.l.b16 %v168
    %v364 = vunpack.c.h.b16 %v168
    %v365 = vunpack.c.l.b16 %v169
    %v366 = vunpack.c.h.b16 %v169
    %v367 = vunpack.c.l.b16 %v170
    %v368 = vunpack.c.h.b16 %v170
    %v369 = vunpack.c.l.b16 %v171
    %v370 = vunpack.c.h.b16 %v171
    %v371 = vunpack.c.l.b16 %v172
    %v372 = vunpack.c.h.b16 %v172
    %v373 = vunpack.c.l.b16 %v173
    %v374 = vunpack.c.h.b16 %v173
    %v375 = vunpack.c.l.b16 %v174
    %v376 = vunpack.c.h.b16 %v174
    %v377 = vunpack.c.l.b16 %v175
    %v378 = vunpack.c.h.b16 %v175
    %v379 = vunpack.c.l.b16 %v176
    %v380 = vunpack.c.h.b16 %v176
    %v381 = vunpack.c.l.b16 %v177
    %v382 = vunpack.c.h.b16 %v177
    %v383 = vunpack.c.l.b16 %v178
    %v384 = vunpack.c.h.b16 %v178
    %v385 = vunpack.c.l.b16 %v179
    %v386 = vunpack.c.h.b16 %v179
    %v387 = vunpack.c.l.b16 %v180
    %v388 = vunpack.c.h.b16 %v180
    %v389 = vunpack.c.l.b16 %v181
    %v390 = vunpack.c.h.b16 %v181
    %v391 = vunpack.c.l.b16 %v182
    %v392 = vunpack.c.h.b16 %v182
    %v393 = vpack.c.b16 %v273, %v265
    %v394 = vpack.c.b16 %v274, %v266
    %v395 = vpack.c.b16 %v275, %v267
    %v396 = vpack.c.b16 %v276, %v268
    %v397 = vpack.c.b16 %v277, %v269
    %v398 = vpack.c.b16 %v278, %v270
    %v399 = vpack.c.b16 %v279, %v271
    %v400 = vpack.c.b16 %v280, %v272
    %v401 = vpack.c.b16 %v289, %v281
    %v402 = vpack.c.b16 %v290, %v282
    %v403 = vpack.c.b16 %v291, %v283
    %v404 = vpack.c.b16 %v292, %v284
    %v405 = vpack.c.b16 %v293, %v285
    %v406 = vpack.c.b16 %v294, %v286
    %v407 = vpack.c.b16 %v295, %v287
    %v408 = vpack.c.b16 %v296, %v288
    %v409 = vpack.c.b16 %v305, %v297
    %v410 = vpack.c.b16 %v306, %v298
    %v411 = vpack.c.b16 %v307, %v299
    %v412 = vpack.c.b16 %v308, %v300
    %v413 = vpack.c.b16 %v309, %v301
    %v414 = vpack.c.b16 %v310, %v302
    %v415 = vpack.c.b16 %v311, %v303
    %v416 = vpack.c.b16 %v312, %v304
    %v417 = vpack.c.b16 %v321, %v313
    %v418 = vpack.c.b16 %v322, %v314
    %v419 = vpack.c.b16 %v323, %v315
    %v420 = vpack.c.b16 %v324, %v316
    %v421 = vpack.c.b16 %v325, %v317
    %v422 = vpack.c.b16 %v326, %v318
    %v423 = vpack.c.b16 %v327, %v319
    %v424 = vpack.c.b16 %v328, %v320
    %v425 = vpack.c.b16 %v337, %v329
    %v426 = vpack.c.b16 %v338, %v330
    %v427 = vpack.c.b16 %v339, %v331
    %v428 = vpack.c.b16 %v340, %v332
    %v429 = vpack.c.b16 %v341, %v333
    %v430 = vpack.c.b16 %v342, %v334
    %v431 = vpack.c.b16 %v343, %v335
    %v432 = vpack.c.b16 %v344, %v336
    %v433 = vpack.c.b16 %v353, %v345
    %v434 = vpack.c.b16 %v354, %v346
    %v435 = vpack.c.b16 %v355, %v347
    %v436 = vpack.c.b16 %v356, %v348
    %v437 = vpack.c.b16 %v357, %v349
    %v438 = vpack.c.b16 %v358, %v350
    %v439 = vpack.c.b16 %v359, %v351
    %v440 = vpack.c.b16 %v360, %v352
    %v441 = vpack.c.b16 %v369, %v361
    %v442 = vpack.c.b16 %v370, %v362
    %v443 = vpack.c.b16 %v371, %v363
    %v444 = vpack.c.b16 %v372, %v364
    %v445 = vpack.c.b16 %v373, %v365
    %v446 = vpack.c.b16 %v374, %v366
    %v447 = vpack.c.b16 %v375, %v367
    %v448 = vpack.c.b16 %v376, %v368
    %v449 = vpack.c.b16 %v385, %v377
    %v450 = vpack.c.b16 %v386, %v378
    %v451 = vpack.c.b16 %v387, %v379
    %v452 = vpack.c.b16 %v388, %v380
    %v453 = vpack.c.b16 %v389, %v381
    %v454 = vpack.c.b16 %v390, %v382
    %v455 = vpack.c.b16 %v391, %v383
    %v456 = vpack.c.b16 %v392, %v384
    %521 = vmatpush.bf16.msra.mxu0 %v449
    %522 = vmatpush.bf16.msra.mxu0 %v441
    %523 = vmatpush.bf16.msra.mxu0 %v433
    %524 = vmatpush.bf16.msra.mxu0 %v425
    %525 = vmatpush.bf16.msra.mxu0 %v417
    %526 = vmatpush.bf16.msra.mxu0 %v409
    %527 = vmatpush.bf16.msra.mxu0 %v401
    %528 = vmatpush.bf16.msra.mxu0 %v393
    %529 = vmatmul.bf16.gmra.mxu0 %v118
    %v530 = vpop.f32.mrf.mxu0
    %v531 = vadd.f32 %v185, %v530
    %v532 = vpop.f32.mrf.mxu0
    %533 = vdwg.mxu0
    %534 = vmatpush.bf16.msra.mxu0 %v450
    %535 = vmatpush.bf16.msra.mxu0 %v442
    %536 = vmatpush.bf16.msra.mxu0 %v434
    %537 = vmatpush.bf16.msra.mxu0 %v426
    %538 = vmatpush.bf16.msra.mxu0 %v418
    %539 = vmatpush.bf16.msra.mxu0 %v410
    %540 = vmatpush.bf16.msra.mxu0 %v402
    %541 = vmatpush.bf16.msra.mxu0 %v394
    %542 = vmatmul.bf16.gmra.mxu0 %v118
    %v543 = vpop.f32.mrf.mxu0
    %v544 = vadd.f32 %v186, %v543
    %v545 = vpop.f32.mrf.mxu0
    %546 = vdwg.mxu0
    %547 = vmatpush.bf16.msra.mxu0 %v451
    %548 = vmatpush.bf16.msra.mxu0 %v443
    %549 = vmatpush.bf16.msra.mxu0 %v435
    %550 = vmatpush.bf16.msra.mxu0 %v427
    %551 = vmatpush.bf16.msra.mxu0 %v419
    %552 = vmatpush.bf16.msra.mxu0 %v411
    %553 = vmatpush.bf16.msra.mxu0 %v403
    %554 = vmatpush.bf16.msra.mxu0 %v395
    %555 = vmatmul.bf16.gmra.mxu0 %v118
    %v556 = vpop.f32.mrf.mxu0
    %v557 = vadd.f32 %v187, %v556
    %v558 = vpop.f32.mrf.mxu0
    %559 = vdwg.mxu0
    %560 = vmatpush.bf16.msra.mxu0 %v452
    %561 = vmatpush.bf16.msra.mxu0 %v444
    %562 = vmatpush.bf16.msra.mxu0 %v436
    %563 = vmatpush.bf16.msra.mxu0 %v428
    %564 = vmatpush.bf16.msra.mxu0 %v420
    %565 = vmatpush.bf16.msra.mxu0 %v412
    %566 = vmatpush.bf16.msra.mxu0 %v404
    %567 = vmatpush.bf16.msra.mxu0 %v396
    %568 = vmatmul.bf16.gmra.mxu0 %v118
    %v569 = vpop.f32.mrf.mxu0
    %v570 = vadd.f32 %v188, %v569
    %v571 = vpop.f32.mrf.mxu0
    %572 = vdwg.mxu0
    %573 = vmatpush.bf16.msra.mxu0 %v453
    %574 = vmatpush.bf16.msra.mxu0 %v445
    %575 = vmatpush.bf16.msra.mxu0 %v437
    %576 = vmatpush.bf16.msra.mxu0 %v429
    %577 = vmatpush.bf16.msra.mxu0 %v421
    %578 = vmatpush.bf16.msra.mxu0 %v413
    %579 = vmatpush.bf16.msra.mxu0 %v405
    %580 = vmatpush.bf16.msra.mxu0 %v397
    %581 = vmatmul.bf16.gmra.mxu0 %v118
    %v582 = vpop.f32.mrf.mxu0
    %v583 = vadd.f32 %v189, %v582
    %v584 = vpop.f32.mrf.mxu0
    %585 = vdwg.mxu0
    %586 = vmatpush.bf16.msra.mxu0 %v454
    %587 = vmatpush.bf16.msra.mxu0 %v446
    %588 = vmatpush.bf16.msra.mxu0 %v438
    %589 = vmatpush.bf16.msra.mxu0 %v430
    %590 = vmatpush.bf16.msra.mxu0 %v422
    %591 = vmatpush.bf16.msra.mxu0 %v414
    %592 = vmatpush.bf16.msra.mxu0 %v406
    %593 = vmatpush.bf16.msra.mxu0 %v398
    %594 = vmatmul.bf16.gmra.mxu0 %v118
    %v595 = vpop.f32.mrf.mxu0
    %v596 = vadd.f32 %v190, %v595
    %v597 = vpop.f32.mrf.mxu0
    %598 = vdwg.mxu0
    %599 = vmatpush.bf16.msra.mxu0 %v455
    %600 = vmatpush.bf16.msra.mxu0 %v447
    %601 = vmatpush.bf16.msra.mxu0 %v439
    %602 = vmatpush.bf16.msra.mxu0 %v431
    %603 = vmatpush.bf16.msra.mxu0 %v423
    %604 = vmatpush.bf16.msra.mxu0 %v415
    %605 = vmatpush.bf16.msra.mxu0 %v407
    %606 = vmatpush.bf16.msra.mxu0 %v399
    %607 = vmatmul.bf16.gmra.mxu0 %v118
    %v608 = vpop.f32.mrf.mxu0
    %v609 = vadd.f32 %v191, %v608
    %v610 = vpop.f32.mrf.mxu0
    %611 = vdwg.mxu0
    %612 = vmatpush.bf16.msra.mxu0 %v456
    %613 = vmatpush.bf16.msra.mxu0 %v448
    %614 = vmatpush.bf16.msra.mxu0 %v440
    %615 = vmatpush.bf16.msra.mxu0 %v432
    %616 = vmatpush.bf16.msra.mxu0 %v424
    %617 = vmatpush.bf16.msra.mxu0 %v416
    %618 = vmatpush.bf16.msra.mxu0 %v408
    %619 = vmatpush.bf16.msra.mxu0 %v400
    %620 = vmatmul.bf16.gmra.mxu0 %v118
    %v621 = vpop.f32.mrf.mxu0
    %v622 = vadd.f32 %v192, %v621
    %v623 = vpop.f32.mrf.mxu0
    %624 = vdwg.mxu0
    %v625 = vmax.f32 %v531, 0.0
    %v626 = vmax.f32 %v544, 0.0
    %v627 = vmax.f32 %v557, 0.0
    %v628 = vmax.f32 %v570, 0.0
    %v629 = vmax.f32 %v583, 0.0
    %v630 = vmax.f32 %v596, 0.0
    %v631 = vmax.f32 %v609, 0.0
    %v632 = vmax.f32 %v622, 0.0
    %v633 = vpack.c.bf16 %v625, %v625
    %v634 = vpack.c.bf16 %v626, %v626
    %v635 = vpack.c.bf16 %v627, %v627
    %v636 = vpack.c.bf16 %v628, %v628
    %v637 = vpack.c.bf16 %v629, %v629
    %v638 = vpack.c.bf16 %v630, %v630
    %v639 = vpack.c.bf16 %v631, %v631
    %v640 = vpack.c.bf16 %v632, %v632
    %v641 = vld [vmem:[#allocation5] sm:$0xff]
    %v642 = vld [vmem:[#allocation5 + $0x8] sm:$0xff]
    %v643 = vld [vmem:[#allocation5 + $0x10] sm:$0xff]
    %v644 = vld [vmem:[#allocation5 + $0x18] sm:$0xff]
    %v645 = vld [vmem:[#allocation5 + $0x20] sm:$0xff]
    %v646 = vld [vmem:[#allocation5 + $0x28] sm:$0xff]
    %v647 = vld [vmem:[#allocation5 + $0x30] sm:$0xff]
    %v648 = vld [vmem:[#allocation5 + $0x38] sm:$0xff]
    %v649 = vld [vmem:[#allocation5 + $0x40] sm:$0xff]
    %v650 = vld [vmem:[#allocation5 + $0x48] sm:$0xff]
    %v651 = vld [vmem:[#allocation5 + $0x50] sm:$0xff]
    %v652 = vld [vmem:[#allocation5 + $0x58] sm:$0xff]
    %v653 = vld [vmem:[#allocation5 + $0x60] sm:$0xff]
    %v654 = vld [vmem:[#allocation5 + $0x68] sm:$0xff]
    %v655 = vld [vmem:[#allocation5 + $0x70] sm:$0xff]
    %v656 = vld [vmem:[#allocation5 + $0x78] sm:$0xff]
    %v657 = vld [vmem:[#allocation5 + $0x80] sm:$0xff]
    %v658 = vld [vmem:[#allocation5 + $0x88] sm:$0xff]
    %v659 = vld [vmem:[#allocation5 + $0x90] sm:$0xff]
    %v660 = vld [vmem:[#allocation5 + $0x98] sm:$0xff]
    %v661 = vld [vmem:[#allocation5 + $0xa0] sm:$0xff]
    %v662 = vld [vmem:[#allocation5 + $0xa8] sm:$0xff]
    %v663 = vld [vmem:[#allocation5 + $0xb0] sm:$0xff]
    %v664 = vld [vmem:[#allocation5 + $0xb8] sm:$0xff]
    %v665 = vld [vmem:[#allocation5 + $0xc0] sm:$0xff]
    %v666 = vld [vmem:[#allocation5 + $0xc8] sm:$0xff]
    %v667 = vld [vmem:[#allocation5 + $0xd0] sm:$0xff]
    %v668 = vld [vmem:[#allocation5 + $0xd8] sm:$0xff]
    %v669 = vld [vmem:[#allocation5 + $0xe0] sm:$0xff]
    %v670 = vld [vmem:[#allocation5 + $0xe8] sm:$0xff]
    %v671 = vld [vmem:[#allocation5 + $0xf0] sm:$0xff]
    %v672 = vld [vmem:[#allocation5 + $0xf8] sm:$0xff]
    %v673 = vld [vmem:[#allocation5 + $0x100] sm:$0xff]
    %v674 = vld [vmem:[#allocation5 + $0x108] sm:$0xff]
    %v675 = vld [vmem:[#allocation5 + $0x110] sm:$0xff]
    %v676 = vld [vmem:[#allocation5 + $0x118] sm:$0xff]
    %v677 = vld [vmem:[#allocation5 + $0x120] sm:$0xff]
    %v678 = vld [vmem:[#allocation5 + $0x128] sm:$0xff]
    %v679 = vld [vmem:[#allocation5 + $0x130] sm:$0xff]
    %v680 = vld [vmem:[#allocation5 + $0x138] sm:$0xff]
    %v681 = vld [vmem:[#allocation5 + $0x140] sm:$0xff]
    %v682 = vld [vmem:[#allocation5 + $0x148] sm:$0xff]
    %v683 = vld [vmem:[#allocation5 + $0x150] sm:$0xff]
    %v684 = vld [vmem:[#allocation5 + $0x158] sm:$0xff]
    %v685 = vld [vmem:[#allocation5 + $0x160] sm:$0xff]
    %v686 = vld [vmem:[#allocation5 + $0x168] sm:$0xff]
    %v687 = vld [vmem:[#allocation5 + $0x170] sm:$0xff]
    %v688 = vld [vmem:[#allocation5 + $0x178] sm:$0xff]
    %v689 = vld [vmem:[#allocation5 + $0x180] sm:$0xff]
    %v690 = vld [vmem:[#allocation5 + $0x188] sm:$0xff]
    %v691 = vld [vmem:[#allocation5 + $0x190] sm:$0xff]
    %v692 = vld [vmem:[#allocation5 + $0x198] sm:$0xff]
    %v693 = vld [vmem:[#allocation5 + $0x1a0] sm:$0xff]
    %v694 = vld [vmem:[#allocation5 + $0x1a8] sm:$0xff]
    %v695 = vld [vmem:[#allocation5 + $0x1b0] sm:$0xff]
    %v696 = vld [vmem:[#allocation5 + $0x1b8] sm:$0xff]
    %v697 = vld [vmem:[#allocation5 + $0x1c0] sm:$0xff]
    %v698 = vld [vmem:[#allocation5 + $0x1c8] sm:$0xff]
    %v699 = vld [vmem:[#allocation5 + $0x1d0] sm:$0xff]
    %v700 = vld [vmem:[#allocation5 + $0x1d8] sm:$0xff]
    %v701 = vld [vmem:[#allocation5 + $0x1e0] sm:$0xff]
    %v702 = vld [vmem:[#allocation5 + $0x1e8] sm:$0xff]
    %v703 = vld [vmem:[#allocation5 + $0x1f0] sm:$0xff]
    %v704 = vld [vmem:[#allocation5 + $0x1f8] sm:$0xff]
    %v705 = vld [vmem:[#allocation5 + $0x200] sm:$0xff]
    %v706 = vld [vmem:[#allocation5 + $0x208] sm:$0xff]
    %v707 = vld [vmem:[#allocation5 + $0x210] sm:$0xff]
    %v708 = vld [vmem:[#allocation5 + $0x218] sm:$0xff]
    %v709 = vld [vmem:[#allocation5 + $0x220] sm:$0xff]
    %v710 = vld [vmem:[#allocation5 + $0x228] sm:$0xff]
    %v711 = vld [vmem:[#allocation5 + $0x230] sm:$0xff]
    %v712 = vld [vmem:[#allocation5 + $0x238] sm:$0xff]
    %v713 = vld [vmem:[#allocation5 + $0x240] sm:$0xff]
    %v714 = vld [vmem:[#allocation5 + $0x248] sm:$0xff]
    %v715 = vld [vmem:[#allocation5 + $0x250] sm:$0xff]
    %v716 = vld [vmem:[#allocation5 + $0x258] sm:$0xff]
    %v717 = vld [vmem:[#allocation5 + $0x260] sm:$0xff]
    %v718 = vld [vmem:[#allocation5 + $0x268] sm:$0xff]
    %v719 = vld [vmem:[#allocation5 + $0x270] sm:$0xff]
    %v720 = vld [vmem:[#allocation5 + $0x278] sm:$0xff]
    %v721 = vld [vmem:[#allocation5 + $0x280] sm:$0xff]
    %v722 = vld [vmem:[#allocation5 + $0x288] sm:$0xff]
    %v723 = vld [vmem:[#allocation5 + $0x290] sm:$0xff]
    %v724 = vld [vmem:[#allocation5 + $0x298] sm:$0xff]
    %v725 = vld [vmem:[#allocation5 + $0x2a0] sm:$0xff]
    %v726 = vld [vmem:[#allocation5 + $0x2a8] sm:$0xff]
    %v727 = vld [vmem:[#allocation5 + $0x2b0] sm:$0xff]
    %v728 = vld [vmem:[#allocation5 + $0x2b8] sm:$0xff]
    %v729 = vld [vmem:[#allocation5 + $0x2c0] sm:$0xff]
    %v730 = vld [vmem:[#allocation5 + $0x2c8] sm:$0xff]
    %v731 = vld [vmem:[#allocation5 + $0x2d0] sm:$0xff]
    %v732 = vld [vmem:[#allocation5 + $0x2d8] sm:$0xff]
    %v733 = vld [vmem:[#allocation5 + $0x2e0] sm:$0xff]
    %v734 = vld [vmem:[#allocation5 + $0x2e8] sm:$0xff]
    %v735 = vld [vmem:[#allocation5 + $0x2f0] sm:$0xff]
    %v736 = vld [vmem:[#allocation5 + $0x2f8] sm:$0xff]
    %v737 = vld [vmem:[#allocation5 + $0x300] sm:$0xff]
    %v738 = vld [vmem:[#allocation5 + $0x308] sm:$0xff]
    %v739 = vld [vmem:[#allocation5 + $0x310] sm:$0xff]
    %v740 = vld [vmem:[#allocation5 + $0x318] sm:$0xff]
    %v741 = vld [vmem:[#allocation5 + $0x320] sm:$0xff]
    %v742 = vld [vmem:[#allocation5 + $0x328] sm:$0xff]
    %v743 = vld [vmem:[#allocation5 + $0x330] sm:$0xff]
    %v744 = vld [vmem:[#allocation5 + $0x338] sm:$0xff]
    %v745 = vld [vmem:[#allocation5 + $0x340] sm:$0xff]
    %v746 = vld [vmem:[#allocation5 + $0x348] sm:$0xff]
    %v747 = vld [vmem:[#allocation5 + $0x350] sm:$0xff]
    %v748 = vld [vmem:[#allocation5 + $0x358] sm:$0xff]
    %v749 = vld [vmem:[#allocation5 + $0x360] sm:$0xff]
    %v750 = vld [vmem:[#allocation5 + $0x368] sm:$0xff]
    %v751 = vld [vmem:[#allocation5 + $0x370] sm:$0xff]
    %v752 = vld [vmem:[#allocation5 + $0x378] sm:$0xff]
    %v753 = vld [vmem:[#allocation5 + $0x380] sm:$0xff]
    %v754 = vld [vmem:[#allocation5 + $0x388] sm:$0xff]
    %v755 = vld [vmem:[#allocation5 + $0x390] sm:$0xff]
    %v756 = vld [vmem:[#allocation5 + $0x398] sm:$0xff]
    %v757 = vld [vmem:[#allocation5 + $0x3a0] sm:$0xff]
    %v758 = vld [vmem:[#allocation5 + $0x3a8] sm:$0xff]
    %v759 = vld [vmem:[#allocation5 + $0x3b0] sm:$0xff]
    %v760 = vld [vmem:[#allocation5 + $0x3b8] sm:$0xff]
    %v761 = vld [vmem:[#allocation5 + $0x3c0] sm:$0xff]
    %v762 = vld [vmem:[#allocation5 + $0x3c8] sm:$0xff]
    %v763 = vld [vmem:[#allocation5 + $0x3d0] sm:$0xff]
    %v764 = vld [vmem:[#allocation5 + $0x3d8] sm:$0xff]
    %v765 = vld [vmem:[#allocation5 + $0x3e0] sm:$0xff]
    %v766 = vld [vmem:[#allocation5 + $0x3e8] sm:$0xff]
    %v767 = vld [vmem:[#allocation5 + $0x3f0] sm:$0xff]
    %v768 = vld [vmem:[#allocation5 + $0x3f8] sm:$0xff]
    %v769 = vld [vmem:[%s4] sm:$0x3]
    %v771 = vperm.slane %v769, 0
    %v772 = vperm.slane %v769, 1
    %v903 = vunpack.c.l.b16 %v641
    %v904 = vunpack.c.h.b16 %v641
    %v905 = vunpack.c.l.b16 %v642
    %v906 = vunpack.c.h.b16 %v642
    %v907 = vunpack.c.l.b16 %v643
    %v908 = vunpack.c.h.b16 %v643
    %v909 = vunpack.c.l.b16 %v644
    %v910 = vunpack.c.h.b16 %v644
    %v911 = vunpack.c.l.b16 %v645
    %v912 = vunpack.c.h.b16 %v645
    %v913 = vunpack.c.l.b16 %v646
    %v914 = vunpack.c.h.b16 %v646
    %v915 = vunpack.c.l.b16 %v647
    %v916 = vunpack.c.h.b16 %v647
    %v917 = vunpack.c.l.b16 %v648
    %v918 = vunpack.c.h.b16 %v648
    %v919 = vunpack.c.l.b16 %v649
    %v920 = vunpack.c.h.b16 %v649
    %v921 = vunpack.c.l.b16 %v650
    %v922 = vunpack.c.h.b16 %v650
    %v923 = vunpack.c.l.b16 %v651
    %v924 = vunpack.c.h.b16 %v651
    %v925 = vunpack.c.l.b16 %v652
    %v926 = vunpack.c.h.b16 %v652
    %v927 = vunpack.c.l.b16 %v653
    %v928 = vunpack.c.h.b16 %v653
    %v929 = vunpack.c.l.b16 %v654
    %v930 = vunpack.c.h.b16 %v654
    %v931 = vunpack.c.l.b16 %v655
    %v932 = vunpack.c.h.b16 %v655
    %v933 = vunpack.c.l.b16 %v656
    %v934 = vunpack.c.h.b16 %v656
    %v935 = vunpack.c.l.b16 %v657
    %v936 = vunpack.c.h.b16 %v657
    %v937 = vunpack.c.l.b16 %v658
    %v938 = vunpack.c.h.b16 %v658
    %v939 = vunpack.c.l.b16 %v659
    %v940 = vunpack.c.h.b16 %v659
    %v941 = vunpack.c.l.b16 %v660
    %v942 = vunpack.c.h.b16 %v660
    %v943 = vunpack.c.l.b16 %v661
    %v944 = vunpack.c.h.b16 %v661
    %v945 = vunpack.c.l.b16 %v662
    %v946 = vunpack.c.h.b16 %v662
    %v947 = vunpack.c.l.b16 %v663
    %v948 = vunpack.c.h.b16 %v663
    %v949 = vunpack.c.l.b16 %v664
    %v950 = vunpack.c.h.b16 %v664
    %v951 = vunpack.c.l.b16 %v665
    %v952 = vunpack.c.h.b16 %v665
    %v953 = vunpack.c.l.b16 %v666
    %v954 = vunpack.c.h.b16 %v666
    %v955 = vunpack.c.l.b16 %v667
    %v956 = vunpack.c.h.b16 %v667
    %v957 = vunpack.c.l.b16 %v668
    %v958 = vunpack.c.h.b16 %v668
    %v959 = vunpack.c.l.b16 %v669
    %v960 = vunpack.c.h.b16 %v669
    %v961 = vunpack.c.l.b16 %v670
    %v962 = vunpack.c.h.b16 %v670
    %v963 = vunpack.c.l.b16 %v671
    %v964 = vunpack.c.h.b16 %v671
    %v965 = vunpack.c.l.b16 %v672
    %v966 = vunpack.c.h.b16 %v672
    %v967 = vunpack.c.l.b16 %v673
    %v968 = vunpack.c.h.b16 %v673
    %v969 = vunpack.c.l.b16 %v674
    %v970 = vunpack.c.h.b16 %v674
    %v971 = vunpack.c.l.b16 %v675
    %v972 = vunpack.c.h.b16 %v675
    %v973 = vunpack.c.l.b16 %v676
    %v974 = vunpack.c.h.b16 %v676
    %v975 = vunpack.c.l.b16 %v677
    %v976 = vunpack.c.h.b16 %v677
    %v977 = vunpack.c.l.b16 %v678
    %v978 = vunpack.c.h.b16 %v678
    %v979 = vunpack.c.l.b16 %v679
    %v980 = vunpack.c.h.b16 %v679
    %v981 = vunpack.c.l.b16 %v680
    %v982 = vunpack.c.h.b16 %v680
    %v983 = vunpack.c.l.b16 %v681
    %v984 = vunpack.c.h.b16 %v681
    %v985 = vunpack.c.l.b16 %v682
    %v986 = vunpack.c.h.b16 %v682
    %v987 = vunpack.c.l.b16 %v683
    %v988 = vunpack.c.h.b16 %v683
    %v989 = vunpack.c.l.b16 %v684
    %v990 = vunpack.c.h.b16 %v684
    %v991 = vunpack.c.l.b16 %v685
    %v992 = vunpack.c.h.b16 %v685
    %v993 = vunpack.c.l.b16 %v686
    %v994 = vunpack.c.h.b16 %v686
    %v995 = vunpack.c.l.b16 %v687
    %v996 = vunpack.c.h.b16 %v687
    %v997 = vunpack.c.l.b16 %v688
    %v998 = vunpack.c.h.b16 %v688
    %v999 = vunpack.c.l.b16 %v689
    %v1000 = vunpack.c.h.b16 %v689
    %v1001 = vunpack.c.l.b16 %v690
    %v1002 = vunpack.c.h.b16 %v690
    %v1003 = vunpack.c.l.b16 %v691
    %v1004 = vunpack.c.h.b16 %v691
    %v1005 = vunpack.c.l.b16 %v692
    %v1006 = vunpack.c.h.b16 %v692
    %v1007 = vunpack.c.l.b16 %v693
    %v1008 = vunpack.c.h.b16 %v693
    %v1009 = vunpack.c.l.b16 %v694
    %v1010 = vunpack.c.h.b16 %v694
    %v1011 = vunpack.c.l.b16 %v695
    %v1012 = vunpack.c.h.b16 %v695
    %v1013 = vunpack.c.l.b16 %v696
    %v1014 = vunpack.c.h.b16 %v696
    %v1015 = vunpack.c.l.b16 %v697
    %v1016 = vunpack.c.h.b16 %v697
    %v1017 = vunpack.c.l.b16 %v698
    %v1018 = vunpack.c.h.b16 %v698
    %v1019 = vunpack.c.l.b16 %v699
    %v1020 = vunpack.c.h.b16 %v699
    %v1021 = vunpack.c.l.b16 %v700
    %v1022 = vunpack.c.h.b16 %v700
    %v1023 = vunpack.c.l.b16 %v701
    %v1024 = vunpack.c.h.b16 %v701
    %v1025 = vunpack.c.l.b16 %v702
    %v1026 = vunpack.c.h.b16 %v702
    %v1027 = vunpack.c.l.b16 %v703
    %v1028 = vunpack.c.h.b16 %v703
    %v1029 = vunpack.c.l.b16 %v704
    %v1030 = vunpack.c.h.b16 %v704
    %v1031 = vunpack.c.l.b16 %v705
    %v1032 = vunpack.c.h.b16 %v705
    %v1033 = vunpack.c.l.b16 %v706
    %v1034 = vunpack.c.h.b16 %v706
    %v1035 = vunpack.c.l.b16 %v707
    %v1036 = vunpack.c.h.b16 %v707
    %v1037 = vunpack.c.l.b16 %v708
    %v1038 = vunpack.c.h.b16 %v708
    %v1039 = vunpack.c.l.b16 %v709
    %v1040 = vunpack.c.h.b16 %v709
    %v1041 = vunpack.c.l.b16 %v710
    %v1042 = vunpack.c.h.b16 %v710
    %v1043 = vunpack.c.l.b16 %v711
    %v1044 = vunpack.c.h.b16 %v711
    %v1045 = vunpack.c.l.b16 %v712
    %v1046 = vunpack.c.h.b16 %v712
    %v1047 = vunpack.c.l.b16 %v713
    %v1048 = vunpack.c.h.b16 %v713
    %v1049 = vunpack.c.l.b16 %v714
    %v1050 = vunpack.c.h.b16 %v714
    %v1051 = vunpack.c.l.b16 %v715
    %v1052 = vunpack.c.h.b16 %v715
    %v1053 = vunpack.c.l.b16 %v716
    %v1054 = vunpack.c.h.b16 %v716
    %v1055 = vunpack.c.l.b16 %v717
    %v1056 = vunpack.c.h.b16 %v717
    %v1057 = vunpack.c.l.b16 %v718
    %v1058 = vunpack.c.h.b16 %v718
    %v1059 = vunpack.c.l.b16 %v719
    %v1060 = vunpack.c.h.b16 %v719
    %v1061 = vunpack.c.l.b16 %v720
    %v1062 = vunpack.c.h.b16 %v720
    %v1063 = vunpack.c.l.b16 %v721
    %v1064 = vunpack.c.h.b16 %v721
    %v1065 = vunpack.c.l.b16 %v722
    %v1066 = vunpack.c.h.b16 %v722
    %v1067 = vunpack.c.l.b16 %v723
    %v1068 = vunpack.c.h.b16 %v723
    %v1069 = vunpack.c.l.b16 %v724
    %v1070 = vunpack.c.h.b16 %v724
    %v1071 = vunpack.c.l.b16 %v725
    %v1072 = vunpack.c.h.b16 %v725
    %v1073 = vunpack.c.l.b16 %v726
    %v1074 = vunpack.c.h.b16 %v726
    %v1075 = vunpack.c.l.b16 %v727
    %v1076 = vunpack.c.h.b16 %v727
    %v1077 = vunpack.c.l.b16 %v728
    %v1078 = vunpack.c.h.b16 %v728
    %v1079 = vunpack.c.l.b16 %v729
    %v1080 = vunpack.c.h.b16 %v729
    %v1081 = vunpack.c.l.b16 %v730
    %v1082 = vunpack.c.h.b16 %v730
    %v1083 = vunpack.c.l.b16 %v731
    %v1084 = vunpack.c.h.b16 %v731
    %v1085 = vunpack.c.l.b16 %v732
    %v1086 = vunpack.c.h.b16 %v732
    %v1087 = vunpack.c.l.b16 %v733
    %v1088 = vunpack.c.h.b16 %v733
    %v1089 = vunpack.c.l.b16 %v734
    %v1090 = vunpack.c.h.b16 %v734
    %v1091 = vunpack.c.l.b16 %v735
    %v1092 = vunpack.c.h.b16 %v735
    %v1093 = vunpack.c.l.b16 %v736
    %v1094 = vunpack.c.h.b16 %v736
    %v1095 = vunpack.c.l.b16 %v737
    %v1096 = vunpack.c.h.b16 %v737
    %v1097 = vunpack.c.l.b16 %v738
    %v1098 = vunpack.c.h.b16 %v738
    %v1099 = vunpack.c.l.b16 %v739
    %v1100 = vunpack.c.h.b16 %v739
    %v1101 = vunpack.c.l.b16 %v740
    %v1102 = vunpack.c.h.b16 %v740
    %v1103 = vunpack.c.l.b16 %v741
    %v1104 = vunpack.c.h.b16 %v741
    %v1105 = vunpack.c.l.b16 %v742
    %v1106 = vunpack.c.h.b16 %v742
    %v1107 = vunpack.c.l.b16 %v743
    %v1108 = vunpack.c.h.b16 %v743
    %v1109 = vunpack.c.l.b16 %v744
    %v1110 = vunpack.c.h.b16 %v744
    %v1111 = vunpack.c.l.b16 %v745
    %v1112 = vunpack.c.h.b16 %v745
    %v1113 = vunpack.c.l.b16 %v746
    %v1114 = vunpack.c.h.b16 %v746
    %v1115 = vunpack.c.l.b16 %v747
    %v1116 = vunpack.c.h.b16 %v747
    %v1117 = vunpack.c.l.b16 %v748
    %v1118 = vunpack.c.h.b16 %v748
    %v1119 = vunpack.c.l.b16 %v749
    %v1120 = vunpack.c.h.b16 %v749
    %v1121 = vunpack.c.l.b16 %v750
    %v1122 = vunpack.c.h.b16 %v750
    %v1123 = vunpack.c.l.b16 %v751
    %v1124 = vunpack.c.h.b16 %v751
    %v1125 = vunpack.c.l.b16 %v752
    %v1126 = vunpack.c.h.b16 %v752
    %v1127 = vunpack.c.l.b16 %v753
    %v1128 = vunpack.c.h.b16 %v753
    %v1129 = vunpack.c.l.b16 %v754
    %v1130 = vunpack.c.h.b16 %v754
    %v1131 = vunpack.c.l.b16 %v755
    %v1132 = vunpack.c.h.b16 %v755
    %v1133 = vunpack.c.l.b16 %v756
    %v1134 = vunpack.c.h.b16 %v756
    %v1135 = vunpack.c.l.b16 %v757
    %v1136 = vunpack.c.h.b16 %v757
    %v1137 = vunpack.c.l.b16 %v758
    %v1138 = vunpack.c.h.b16 %v758
    %v1139 = vunpack.c.l.b16 %v759
    %v1140 = vunpack.c.h.b16 %v759
    %v1141 = vunpack.c.l.b16 %v760
    %v1142 = vunpack.c.h.b16 %v760
    %v1143 = vunpack.c.l.b16 %v761
    %v1144 = vunpack.c.h.b16 %v761
    %v1145 = vunpack.c.l.b16 %v762
    %v1146 = vunpack.c.h.b16 %v762
    %v1147 = vunpack.c.l.b16 %v763
    %v1148 = vunpack.c.h.b16 %v763
    %v1149 = vunpack.c.l.b16 %v764
    %v1150 = vunpack.c.h.b16 %v764
    %v1151 = vunpack.c.l.b16 %v765
    %v1152 = vunpack.c.h.b16 %v765
    %v1153 = vunpack.c.l.b16 %v766
    %v1154 = vunpack.c.h.b16 %v766
    %v1155 = vunpack.c.l.b16 %v767
    %v1156 = vunpack.c.h.b16 %v767
    %v1157 = vunpack.c.l.b16 %v768
    %v1158 = vunpack.c.h.b16 %v768
    %v1159 = vpack.c.b16 %v905, %v903
    %v1160 = vpack.c.b16 %v906, %v904
    %v1161 = vpack.c.b16 %v909, %v907
    %v1162 = vpack.c.b16 %v910, %v908
    %v1163 = vpack.c.b16 %v913, %v911
    %v1164 = vpack.c.b16 %v914, %v912
    %v1165 = vpack.c.b16 %v917, %v915
    %v1166 = vpack.c.b16 %v918, %v916
    %v1167 = vpack.c.b16 %v921, %v919
    %v1168 = vpack.c.b16 %v922, %v920
    %v1169 = vpack.c.b16 %v925, %v923
    %v1170 = vpack.c.b16 %v926, %v924
    %v1171 = vpack.c.b16 %v929, %v927
    %v1172 = vpack.c.b16 %v930, %v928
    %v1173 = vpack.c.b16 %v933, %v931
    %v1174 = vpack.c.b16 %v934, %v932
    %v1175 = vpack.c.b16 %v937, %v935
    %v1176 = vpack.c.b16 %v938, %v936
    %v1177 = vpack.c.b16 %v941, %v939
    %v1178 = vpack.c.b16 %v942, %v940
    %v1179 = vpack.c.b16 %v945, %v943
    %v1180 = vpack.c.b16 %v946, %v944
    %v1181 = vpack.c.b16 %v949, %v947
    %v1182 = vpack.c.b16 %v950, %v948
    %v1183 = vpack.c.b16 %v953, %v951
    %v1184 = vpack.c.b16 %v954, %v952
    %v1185 = vpack.c.b16 %v957, %v955
    %v1186 = vpack.c.b16 %v958, %v956
    %v1187 = vpack.c.b16 %v961, %v959
    %v1188 = vpack.c.b16 %v962, %v960
    %v1189 = vpack.c.b16 %v965, %v963
    %v1190 = vpack.c.b16 %v966, %v964
    %v1191 = vpack.c.b16 %v969, %v967
    %v1192 = vpack.c.b16 %v970, %v968
    %v1193 = vpack.c.b16 %v973, %v971
    %v1194 = vpack.c.b16 %v974, %v972
    %v1195 = vpack.c.b16 %v977, %v975
    %v1196 = vpack.c.b16 %v978, %v976
    %v1197 = vpack.c.b16 %v981, %v979
    %v1198 = vpack.c.b16 %v982, %v980
    %v1199 = vpack.c.b16 %v985, %v983
    %v1200 = vpack.c.b16 %v986, %v984
    %v1201 = vpack.c.b16 %v989, %v987
    %v1202 = vpack.c.b16 %v990, %v988
    %v1203 = vpack.c.b16 %v993, %v991
    %v1204 = vpack.c.b16 %v994, %v992
    %v1205 = vpack.c.b16 %v997, %v995
    %v1206 = vpack.c.b16 %v998, %v996
    %v1207 = vpack.c.b16 %v1001, %v999
    %v1208 = vpack.c.b16 %v1002, %v1000
    %v1209 = vpack.c.b16 %v1005, %v1003
    %v1210 = vpack.c.b16 %v1006, %v1004
    %v1211 = vpack.c.b16 %v1009, %v1007
    %v1212 = vpack.c.b16 %v1010, %v1008
    %v1213 = vpack.c.b16 %v1013, %v1011
    %v1214 = vpack.c.b16 %v1014, %v1012
    %v1215 = vpack.c.b16 %v1017, %v1015
    %v1216 = vpack.c.b16 %v1018, %v1016
    %v1217 = vpack.c.b16 %v1021, %v1019
    %v1218 = vpack.c.b16 %v1022, %v1020
    %v1219 = vpack.c.b16 %v1025, %v1023
    %v1220 = vpack.c.b16 %v1026, %v1024
    %v1221 = vpack.c.b16 %v1029, %v1027
    %v1222 = vpack.c.b16 %v1030, %v1028
    %v1223 = vpack.c.b16 %v1033, %v1031
    %v1224 = vpack.c.b16 %v1034, %v1032
    %v1225 = vpack.c.b16 %v1037, %v1035
    %v1226 = vpack.c.b16 %v1038, %v1036
    %v1227 = vpack.c.b16 %v1041, %v1039
    %v1228 = vpack.c.b16 %v1042, %v1040
    %v1229 = vpack.c.b16 %v1045, %v1043
    %v1230 = vpack.c.b16 %v1046, %v1044
    %v1231 = vpack.c.b16 %v1049, %v1047
    %v1232 = vpack.c.b16 %v1050, %v1048
    %v1233 = vpack.c.b16 %v1053, %v1051
    %v1234 = vpack.c.b16 %v1054, %v1052
    %v1235 = vpack.c.b16 %v1057, %v1055
    %v1236 = vpack.c.b16 %v1058, %v1056
    %v1237 = vpack.c.b16 %v1061, %v1059
    %v1238 = vpack.c.b16 %v1062, %v1060
    %v1239 = vpack.c.b16 %v1065, %v1063
    %v1240 = vpack.c.b16 %v1066, %v1064
    %v1241 = vpack.c.b16 %v1069, %v1067
    %v1242 = vpack.c.b16 %v1070, %v1068
    %v1243 = vpack.c.b16 %v1073, %v1071
    %v1244 = vpack.c.b16 %v1074, %v1072
    %v1245 = vpack.c.b16 %v1077, %v1075
    %v1246 = vpack.c.b16 %v1078, %v1076
    %v1247 = vpack.c.b16 %v1081, %v1079
    %v1248 = vpack.c.b16 %v1082, %v1080
    %v1249 = vpack.c.b16 %v1085, %v1083
    %v1250 = vpack.c.b16 %v1086, %v1084
    %v1251 = vpack.c.b16 %v1089, %v1087
    %v1252 = vpack.c.b16 %v1090, %v1088
    %v1253 = vpack.c.b16 %v1093, %v1091
    %v1254 = vpack.c.b16 %v1094, %v1092
    %v1255 = vpack.c.b16 %v1097, %v1095
    %v1256 = vpack.c.b16 %v1098, %v1096
    %v1257 = vpack.c.b16 %v1101, %v1099
    %v1258 = vpack.c.b16 %v1102, %v1100
    %v1259 = vpack.c.b16 %v1105, %v1103
    %v1260 = vpack.c.b16 %v1106, %v1104
    %v1261 = vpack.c.b16 %v1109, %v1107
    %v1262 = vpack.c.b16 %v1110, %v1108
    %v1263 = vpack.c.b16 %v1113, %v1111
    %v1264 = vpack.c.b16 %v1114, %v1112
    %v1265 = vpack.c.b16 %v1117, %v1115
    %v1266 = vpack.c.b16 %v1118, %v1116
    %v1267 = vpack.c.b16 %v1121, %v1119
    %v1268 = vpack.c.b16 %v1122, %v1120
    %v1269 = vpack.c.b16 %v1125, %v1123
    %v1270 = vpack.c.b16 %v1126, %v1124
    %v1271 = vpack.c.b16 %v1129, %v1127
    %v1272 = vpack.c.b16 %v1130, %v1128
    %v1273 = vpack.c.b16 %v1133, %v1131
    %v1274 = vpack.c.b16 %v1134, %v1132
    %v1275 = vpack.c.b16 %v1137, %v1135
    %v1276 = vpack.c.b16 %v1138, %v1136
    %v1277 = vpack.c.b16 %v1141, %v1139
    %v1278 = vpack.c.b16 %v1142, %v1140
    %v1279 = vpack.c.b16 %v1145, %v1143
    %v1280 = vpack.c.b16 %v1146, %v1144
    %v1281 = vpack.c.b16 %v1149, %v1147
    %v1282 = vpack.c.b16 %v1150, %v1148
    %v1283 = vpack.c.b16 %v1153, %v1151
    %v1284 = vpack.c.b16 %v1154, %v1152
    %v1285 = vpack.c.b16 %v1157, %v1155
    %v1286 = vpack.c.b16 %v1158, %v1156
    %1415 = vmatpush.bf16.msra.mxu0 %v1173
    %1416 = vmatpush.bf16.msra.mxu0 %v1171
    %1417 = vmatpush.bf16.msra.mxu0 %v1169
    %1418 = vmatpush.bf16.msra.mxu0 %v1167
    %1419 = vmatpush.bf16.msra.mxu0 %v1165
    %1420 = vmatpush.bf16.msra.mxu0 %v1163
    %1421 = vmatpush.bf16.msra.mxu0 %v1161
    %1422 = vmatpush.bf16.msra.mxu0 %v1159
    %1423 = vmatmul.bf16.gmra.mxu0 %v633
    %v1424 = vpop.f32.mrf.mxu0
    %v1425 = vadd.f32 %v771, %v1424
    %v1426 = vpop.f32.mrf.mxu0
    %1427 = vdwg.mxu0
    %1428 = vmatpush.bf16.msra.mxu0 %v1189
    %1429 = vmatpush.bf16.msra.mxu0 %v1187
    %1430 = vmatpush.bf16.msra.mxu0 %v1185
    %1431 = vmatpush.bf16.msra.mxu0 %v1183
    %1432 = vmatpush.bf16.msra.mxu0 %v1181
    %1433 = vmatpush.bf16.msra.mxu0 %v1179
    %1434 = vmatpush.bf16.msra.mxu0 %v1177
    %1435 = vmatpush.bf16.msra.mxu0 %v1175
    %1436 = vmatmul.bf16.gmra.mxu0 %v634
    %v1437 = vpop.f32.mrf.mxu0
    %v1438 = vadd.f32 %v1425, %v1437
    %v1439 = vpop.f32.mrf.mxu0
    %1440 = vdwg.mxu0
    %1441 = vmatpush.bf16.msra.mxu0 %v1205
    %1442 = vmatpush.bf16.msra.mxu0 %v1203
    %1443 = vmatpush.bf16.msra.mxu0 %v1201
    %1444 = vmatpush.bf16.msra.mxu0 %v1199
    %1445 = vmatpush.bf16.msra.mxu0 %v1197
    %1446 = vmatpush.bf16.msra.mxu0 %v1195
    %1447 = vmatpush.bf16.msra.mxu0 %v1193
    %1448 = vmatpush.bf16.msra.mxu0 %v1191
    %1449 = vmatmul.bf16.gmra.mxu0 %v635
    %v1450 = vpop.f32.mrf.mxu0
    %v1451 = vadd.f32 %v1438, %v1450
    %v1452 = vpop.f32.mrf.mxu0
    %1453 = vdwg.mxu0
    %1454 = vmatpush.bf16.msra.mxu0 %v1221
    %1455 = vmatpush.bf16.msra.mxu0 %v1219
    %1456 = vmatpush.bf16.msra.mxu0 %v1217
    %1457 = vmatpush.bf16.msra.mxu0 %v1215
    %1458 = vmatpush.bf16.msra.mxu0 %v1213
    %1459 = vmatpush.bf16.msra.mxu0 %v1211
    %1460 = vmatpush.bf16.msra.mxu0 %v1209
    %1461 = vmatpush.bf16.msra.mxu0 %v1207
    %1462 = vmatmul.bf16.gmra.mxu0 %v636
    %v1463 = vpop.f32.mrf.mxu0
    %v1464 = vadd.f32 %v1451, %v1463
    %v1465 = vpop.f32.mrf.mxu0
    %1466 = vdwg.mxu0
    %1467 = vmatpush.bf16.msra.mxu0 %v1237
    %1468 = vmatpush.bf16.msra.mxu0 %v1235
    %1469 = vmatpush.bf16.msra.mxu0 %v1233
    %1470 = vmatpush.bf16.msra.mxu0 %v1231
    %1471 = vmatpush.bf16.msra.mxu0 %v1229
    %1472 = vmatpush.bf16.msra.mxu0 %v1227
    %1473 = vmatpush.bf16.msra.mxu0 %v1225
    %1474 = vmatpush.bf16.msra.mxu0 %v1223
    %1475 = vmatmul.bf16.gmra.mxu0 %v637
    %v1476 = vpop.f32.mrf.mxu0
    %v1477 = vadd.f32 %v1464, %v1476
    %v1478 = vpop.f32.mrf.mxu0
    %1479 = vdwg.mxu0
    %1480 = vmatpush.bf16.msra.mxu0 %v1253
    %1481 = vmatpush.bf16.msra.mxu0 %v1251
    %1482 = vmatpush.bf16.msra.mxu0 %v1249
    %1483 = vmatpush.bf16.msra.mxu0 %v1247
    %1484 = vmatpush.bf16.msra.mxu0 %v1245
    %1485 = vmatpush.bf16.msra.mxu0 %v1243
    %1486 = vmatpush.bf16.msra.mxu0 %v1241
    %1487 = vmatpush.bf16.msra.mxu0 %v1239
    %1488 = vmatmul.bf16.gmra.mxu0 %v638
    %v1489 = vpop.f32.mrf.mxu0
    %v1490 = vadd.f32 %v1477, %v1489
    %v1491 = vpop.f32.mrf.mxu0
    %1492 = vdwg.mxu0
    %1493 = vmatpush.bf16.msra.mxu0 %v1269
    %1494 = vmatpush.bf16.msra.mxu0 %v1267
    %1495 = vmatpush.bf16.msra.mxu0 %v1265
    %1496 = vmatpush.bf16.msra.mxu0 %v1263
    %1497 = vmatpush.bf16.msra.mxu0 %v1261
    %1498 = vmatpush.bf16.msra.mxu0 %v1259
    %1499 = vmatpush.bf16.msra.mxu0 %v1257
    %1500 = vmatpush.bf16.msra.mxu0 %v1255
    %1501 = vmatmul.bf16.gmra.mxu0 %v639
    %v1502 = vpop.f32.mrf.mxu0
    %v1503 = vadd.f32 %v1490, %v1502
    %v1504 = vpop.f32.mrf.mxu0
    %1505 = vdwg.mxu0
    %1506 = vmatpush.bf16.msra.mxu0 %v1285
    %1507 = vmatpush.bf16.msra.mxu0 %v1283
    %1508 = vmatpush.bf16.msra.mxu0 %v1281
    %1509 = vmatpush.bf16.msra.mxu0 %v1279
    %1510 = vmatpush.bf16.msra.mxu0 %v1277
    %1511 = vmatpush.bf16.msra.mxu0 %v1275
    %1512 = vmatpush.bf16.msra.mxu0 %v1273
    %1513 = vmatpush.bf16.msra.mxu0 %v1271
    %1514 = vmatmul.bf16.gmra.mxu0 %v640
    %v1515 = vpop.f32.mrf.mxu0
    %v1516 = vadd.f32 %v1503, %v1515
    %v1517 = vpop.f32.mrf.mxu0
    %1518 = vdwg.mxu0
    %1519 = vmatpush.bf16.msra.mxu0 %v1174
    %1520 = vmatpush.bf16.msra.mxu0 %v1172
    %1521 = vmatpush.bf16.msra.mxu0 %v1170
    %1522 = vmatpush.bf16.msra.mxu0 %v1168
    %1523 = vmatpush.bf16.msra.mxu0 %v1166
    %1524 = vmatpush.bf16.msra.mxu0 %v1164
    %1525 = vmatpush.bf16.msra.mxu0 %v1162
    %1526 = vmatpush.bf16.msra.mxu0 %v1160
    %1527 = vmatmul.bf16.gmra.mxu0 %v633
    %v1528 = vpop.f32.mrf.mxu0
    %v1529 = vadd.f32 %v772, %v1528
    %v1530 = vpop.f32.mrf.mxu0
    %1531 = vdwg.mxu0
    %1532 = vmatpush.bf16.msra.mxu0 %v1190
    %1533 = vmatpush.bf16.msra.mxu0 %v1188
    %1534 = vmatpush.bf16.msra.mxu0 %v1186
    %1535 = vmatpush.bf16.msra.mxu0 %v1184
    %1536 = vmatpush.bf16.msra.mxu0 %v1182
    %1537 = vmatpush.bf16.msra.mxu0 %v1180
    %1538 = vmatpush.bf16.msra.mxu0 %v1178
    %1539 = vmatpush.bf16.msra.mxu0 %v1176
    %1540 = vmatmul.bf16.gmra.mxu0 %v634
    %v1541 = vpop.f32.mrf.mxu0
    %v1542 = vadd.f32 %v1529, %v1541
    %v1543 = vpop.f32.mrf.mxu0
    %1544 = vdwg.mxu0
    %1545 = vmatpush.bf16.msra.mxu0 %v1206
    %1546 = vmatpush.bf16.msra.mxu0 %v1204
    %1547 = vmatpush.bf16.msra.mxu0 %v1202
    %1548 = vmatpush.bf16.msra.mxu0 %v1200
    %1549 = vmatpush.bf16.msra.mxu0 %v1198
    %1550 = vmatpush.bf16.msra.mxu0 %v1196
    %1551 = vmatpush.bf16.msra.mxu0 %v1194
    %1552 = vmatpush.bf16.msra.mxu0 %v1192
    %1553 = vmatmul.bf16.gmra.mxu0 %v635
    %v1554 = vpop.f32.mrf.mxu0
    %v1555 = vadd.f32 %v1542, %v1554
    %v1556 = vpop.f32.mrf.mxu0
    %1557 = vdwg.mxu0
    %1558 = vmatpush.bf16.msra.mxu0 %v1222
    %1559 = vmatpush.bf16.msra.mxu0 %v1220
    %1560 = vmatpush.bf16.msra.mxu0 %v1218
    %1561 = vmatpush.bf16.msra.mxu0 %v1216
    %1562 = vmatpush.bf16.msra.mxu0 %v1214
    %1563 = vmatpush.bf16.msra.mxu0 %v1212
    %1564 = vmatpush.bf16.msra.mxu0 %v1210
    %1565 = vmatpush.bf16.msra.mxu0 %v1208
    %1566 = vmatmul.bf16.gmra.mxu0 %v636
    %v1567 = vpop.f32.mrf.mxu0
    %v1568 = vadd.f32 %v1555, %v1567
    %v1569 = vpop.f32.mrf.mxu0
    %1570 = vdwg.mxu0
    %1571 = vmatpush.bf16.msra.mxu0 %v1238
    %1572 = vmatpush.bf16.msra.mxu0 %v1236
    %1573 = vmatpush.bf16.msra.mxu0 %v1234
    %1574 = vmatpush.bf16.msra.mxu0 %v1232
    %1575 = vmatpush.bf16.msra.mxu0 %v1230
    %1576 = vmatpush.bf16.msra.mxu0 %v1228
    %1577 = vmatpush.bf16.msra.mxu0 %v1226
    %1578 = vmatpush.bf16.msra.mxu0 %v1224
    %1579 = vmatmul.bf16.gmra.mxu0 %v637
    %v1580 = vpop.f32.mrf.mxu0
    %v1581 = vadd.f32 %v1568, %v1580
    %v1582 = vpop.f32.mrf.mxu0
    %1583 = vdwg.mxu0
    %1584 = vmatpush.bf16.msra.mxu0 %v1254
    %1585 = vmatpush.bf16.msra.mxu0 %v1252
    %1586 = vmatpush.bf16.msra.mxu0 %v1250
    %1587 = vmatpush.bf16.msra.mxu0 %v1248
    %1588 = vmatpush.bf16.msra.mxu0 %v1246
    %1589 = vmatpush.bf16.msra.mxu0 %v1244
    %1590 = vmatpush.bf16.msra.mxu0 %v1242
    %1591 = vmatpush.bf16.msra.mxu0 %v1240
    %1592 = vmatmul.bf16.gmra.mxu0 %v638
    %v1593 = vpop.f32.mrf.mxu0
    %v1594 = vadd.f32 %v1581, %v1593
    %v1595 = vpop.f32.mrf.mxu0
    %1596 = vdwg.mxu0
    %1597 = vmatpush.bf16.msra.mxu0 %v1270
    %1598 = vmatpush.bf16.msra.mxu0 %v1268
    %1599 = vmatpush.bf16.msra.mxu0 %v1266
    %1600 = vmatpush.bf16.msra.mxu0 %v1264
    %1601 = vmatpush.bf16.msra.mxu0 %v1262
    %1602 = vmatpush.bf16.msra.mxu0 %v1260
    %1603 = vmatpush.bf16.msra.mxu0 %v1258
    %1604 = vmatpush.bf16.msra.mxu0 %v1256
    %1605 = vmatmul.bf16.gmra.mxu0 %v639
    %v1606 = vpop.f32.mrf.mxu0
    %v1607 = vadd.f32 %v1594, %v1606
    %v1608 = vpop.f32.mrf.mxu0
    %1609 = vdwg.mxu0
    %1610 = vmatpush.bf16.msra.mxu0 %v1286
    %1611 = vmatpush.bf16.msra.mxu0 %v1284
    %1612 = vmatpush.bf16.msra.mxu0 %v1282
    %1613 = vmatpush.bf16.msra.mxu0 %v1280
    %1614 = vmatpush.bf16.msra.mxu0 %v1278
    %1615 = vmatpush.bf16.msra.mxu0 %v1276
    %1616 = vmatpush.bf16.msra.mxu0 %v1274
    %1617 = vmatpush.bf16.msra.mxu0 %v1272
    %1618 = vmatmul.bf16.gmra.mxu0 %v640
    %v1619 = vpop.f32.mrf.mxu0
    %v1620 = vadd.f32 %v1607, %v1619
    %v1621 = vpop.f32.mrf.mxu0
    %1622 = vdwg.mxu0
    %v1623 = vmax.f32 %v1516, 0.0
    %v1624 = vmax.f32 %v1620, 0.0
    %v1625 = vpack.c.bf16 %v1623, %v1623
    %v1626 = vpack.c.bf16 %v1624, %v1624
    %v1627 = vld [vmem:[#allocation7] sm:$0xf]
    %v1628 = vld [vmem:[#allocation7 + $0x4] sm:$0xf]
    %v1629 = vld [vmem:[#allocation7 + $0x8] sm:$0xf]
    %v1630 = vld [vmem:[#allocation7 + $0xc] sm:$0xf]
    %v1631 = vld [vmem:[#allocation7 + $0x10] sm:$0xf]
    %v1632 = vld [vmem:[#allocation7 + $0x14] sm:$0xf]
    %v1633 = vld [vmem:[#allocation7 + $0x18] sm:$0xf]
    %v1634 = vld [vmem:[#allocation7 + $0x1c] sm:$0xf]
    %v1635 = vld [vmem:[#allocation7 + $0x20] sm:$0xf]
    %v1636 = vld [vmem:[#allocation7 + $0x24] sm:$0xf]
    %v1637 = vld [vmem:[#allocation7 + $0x28] sm:$0xf]
    %v1638 = vld [vmem:[#allocation7 + $0x2c] sm:$0xf]
    %v1639 = vld [vmem:[#allocation7 + $0x30] sm:$0xf]
    %v1640 = vld [vmem:[#allocation7 + $0x34] sm:$0xf]
    %v1641 = vld [vmem:[#allocation7 + $0x38] sm:$0xf]
    %v1642 = vld [vmem:[#allocation7 + $0x3c] sm:$0xf]
    %v1643 = vld [vmem:[#allocation7 + $0x40] sm:$0xf]
    %v1644 = vld [vmem:[#allocation7 + $0x44] sm:$0xf]
    %v1645 = vld [vmem:[#allocation7 + $0x48] sm:$0xf]
    %v1646 = vld [vmem:[#allocation7 + $0x4c] sm:$0xf]
    %v1647 = vld [vmem:[#allocation7 + $0x50] sm:$0xf]
    %v1648 = vld [vmem:[#allocation7 + $0x54] sm:$0xf]
    %v1649 = vld [vmem:[#allocation7 + $0x58] sm:$0xf]
    %v1650 = vld [vmem:[#allocation7 + $0x5c] sm:$0xf]
    %v1651 = vld [vmem:[#allocation7 + $0x60] sm:$0xf]
    %v1652 = vld [vmem:[#allocation7 + $0x64] sm:$0xf]
    %v1653 = vld [vmem:[#allocation7 + $0x68] sm:$0xf]
    %v1654 = vld [vmem:[#allocation7 + $0x6c] sm:$0xf]
    %v1655 = vld [vmem:[#allocation7 + $0x70] sm:$0xf]
    %v1656 = vld [vmem:[#allocation7 + $0x74] sm:$0xf]
    %v1657 = vld [vmem:[#allocation7 + $0x78] sm:$0xf]
    %v1658 = vld [vmem:[#allocation7 + $0x7c] sm:$0xf]
    %v1659 = vld [vmem:[%s6] sm:$0x1]
    %v1661 = vperm.slane %v1659, 0
    %v1695 = vunpack.c.l.b16 %v1627
    %v1696 = vunpack.c.l.b16 %v1628
    %v1697 = vunpack.c.l.b16 %v1629
    %v1698 = vunpack.c.l.b16 %v1630
    %v1699 = vunpack.c.l.b16 %v1631
    %v1700 = vunpack.c.l.b16 %v1632
    %v1701 = vunpack.c.l.b16 %v1633
    %v1702 = vunpack.c.l.b16 %v1634
    %v1703 = vunpack.c.l.b16 %v1635
    %v1704 = vunpack.c.l.b16 %v1636
    %v1705 = vunpack.c.l.b16 %v1637
    %v1706 = vunpack.c.l.b16 %v1638
    %v1707 = vunpack.c.l.b16 %v1639
    %v1708 = vunpack.c.l.b16 %v1640
    %v1709 = vunpack.c.l.b16 %v1641
    %v1710 = vunpack.c.l.b16 %v1642
    %v1711 = vunpack.c.l.b16 %v1643
    %v1712 = vunpack.c.l.b16 %v1644
    %v1713 = vunpack.c.l.b16 %v1645
    %v1714 = vunpack.c.l.b16 %v1646
    %v1715 = vunpack.c.l.b16 %v1647
    %v1716 = vunpack.c.l.b16 %v1648
    %v1717 = vunpack.c.l.b16 %v1649
    %v1718 = vunpack.c.l.b16 %v1650
    %v1719 = vunpack.c.l.b16 %v1651
    %v1720 = vunpack.c.l.b16 %v1652
    %v1721 = vunpack.c.l.b16 %v1653
    %v1722 = vunpack.c.l.b16 %v1654
    %v1723 = vunpack.c.l.b16 %v1655
    %v1724 = vunpack.c.l.b16 %v1656
    %v1725 = vunpack.c.l.b16 %v1657
    %v1726 = vunpack.c.l.b16 %v1658
    %v1727 = vpack.c.b16 %v1696, %v1695
    %v1728 = vpack.c.b16 %v1698, %v1697
    %v1729 = vpack.c.b16 %v1700, %v1699
    %v1730 = vpack.c.b16 %v1702, %v1701
    %v1731 = vpack.c.b16 %v1704, %v1703
    %v1732 = vpack.c.b16 %v1706, %v1705
    %v1733 = vpack.c.b16 %v1708, %v1707
    %v1734 = vpack.c.b16 %v1710, %v1709
    %v1735 = vpack.c.b16 %v1712, %v1711
    %v1736 = vpack.c.b16 %v1714, %v1713
    %v1737 = vpack.c.b16 %v1716, %v1715
    %v1738 = vpack.c.b16 %v1718, %v1717
    %v1739 = vpack.c.b16 %v1720, %v1719
    %v1740 = vpack.c.b16 %v1722, %v1721
    %v1741 = vpack.c.b16 %v1724, %v1723
    %v1742 = vpack.c.b16 %v1726, %v1725
    %1759 = vmatpush.bf16.msra.mxu0 %v1734
    %1760 = vmatpush.bf16.msra.mxu0 %v1733
    %1761 = vmatpush.bf16.msra.mxu0 %v1732
    %1762 = vmatpush.bf16.msra.mxu0 %v1731
    %1763 = vmatpush.bf16.msra.mxu0 %v1730
    %1764 = vmatpush.bf16.msra.mxu0 %v1729
    %1765 = vmatpush.bf16.msra.mxu0 %v1728
    %1766 = vmatpush.bf16.msra.mxu0 %v1727
    %1767 = vmatmul.bf16.gmra.mxu0 %v1625
    %v1768 = vpop.f32.mrf.mxu0
    %v1769 = vadd.f32 %v1661, %v1768
    %v1770 = vpop.f32.mrf.mxu0
    %1771 = vdwg.mxu0
    %1772 = vmatpush.bf16.msra.mxu0 %v1742
    %1773 = vmatpush.bf16.msra.mxu0 %v1741
    %1774 = vmatpush.bf16.msra.mxu0 %v1740
    %1775 = vmatpush.bf16.msra.mxu0 %v1739
    %1776 = vmatpush.bf16.msra.mxu0 %v1738
    %1777 = vmatpush.bf16.msra.mxu0 %v1737
    %1778 = vmatpush.bf16.msra.mxu0 %v1736
    %1779 = vmatpush.bf16.msra.mxu0 %v1735
    %1780 = vmatmul.bf16.gmra.mxu0 %v1626
    %v1781 = vpop.f32.mrf.mxu0
    %v1782 = vadd.f32 %v1769, %v1781
    %v1783 = vpop.f32.mrf.mxu0
    %1784 = vdwg.mxu0
    %v1785 = vmax.f32 %v1782, 0.0
    %v1786 = vpack.c.bf16 %v1785, %v1785
    %v1787 = vld [vmem:[#allocation8] sm:$0xf]
    %v1788 = vld [vmem:[#allocation8 + $0x4] sm:$0xf]
    %v1789 = vld [vmem:[#allocation8 + $0x8] sm:$0xf]
    %v1790 = vld [vmem:[#allocation8 + $0xc] sm:$0xf]
    %v1791 = vld [vmem:[#allocation8 + $0x10] sm:$0xf]
    %v1792 = vld [vmem:[#allocation8 + $0x14] sm:$0xf]
    %v1793 = vld [vmem:[#allocation8 + $0x18] sm:$0xf]
    %v1794 = vld [vmem:[#allocation8 + $0x1c] sm:$0xf]
    %v1795 = vld [vmem:[#allocation8 + $0x20] sm:$0xf]
    %v1796 = vld [vmem:[#allocation8 + $0x24] sm:$0xf]
    %v1797 = vld [vmem:[#allocation8 + $0x28] sm:$0xf]
    %v1798 = vld [vmem:[#allocation8 + $0x2c] sm:$0xf]
    %v1799 = vld [vmem:[#allocation8 + $0x30] sm:$0xf]
    %v1800 = vld [vmem:[#allocation8 + $0x34] sm:$0xf]
    %v1801 = vld [vmem:[#allocation8 + $0x38] sm:$0xf]
    %v1802 = vld [vmem:[#allocation8 + $0x3c] sm:$0xf]
    %v1803 = vld [vmem:[%s8] sm:$0x1]
    %v1805 = vperm.slane %v1803, 0
    %v1823 = vunpack.c.l.b16 %v1787
    %v1824 = vunpack.c.l.b16 %v1788
    %v1825 = vunpack.c.l.b16 %v1789
    %v1826 = vunpack.c.l.b16 %v1790
    %v1827 = vunpack.c.l.b16 %v1791
    %v1828 = vunpack.c.l.b16 %v1792
    %v1829 = vunpack.c.l.b16 %v1793
    %v1830 = vunpack.c.l.b16 %v1794
    %v1831 = vunpack.c.l.b16 %v1795
    %v1832 = vunpack.c.l.b16 %v1796
    %v1833 = vunpack.c.l.b16 %v1797
    %v1834 = vunpack.c.l.b16 %v1798
    %v1835 = vunpack.c.l.b16 %v1799
    %v1836 = vunpack.c.l.b16 %v1800
    %v1837 = vunpack.c.l.b16 %v1801
    %v1838 = vunpack.c.l.b16 %v1802
    %v1839 = vpack.c.b16 %v1824, %v1823
    %v1840 = vpack.c.b16 %v1826, %v1825
    %v1841 = vpack.c.b16 %v1828, %v1827
    %v1842 = vpack.c.b16 %v1830, %v1829
    %v1843 = vpack.c.b16 %v1832, %v1831
    %v1844 = vpack.c.b16 %v1834, %v1833
    %v1845 = vpack.c.b16 %v1836, %v1835
    %v1846 = vpack.c.b16 %v1838, %v1837
    %1855 = vmatpush.bf16.msra.mxu0 %v1846
    %1856 = vmatpush.bf16.msra.mxu0 %v1845
    %1857 = vmatpush.bf16.msra.mxu0 %v1844
    %1858 = vmatpush.bf16.msra.mxu0 %v1843
    %1859 = vmatpush.bf16.msra.mxu0 %v1842
    %1860 = vmatpush.bf16.msra.mxu0 %v1841
    %1861 = vmatpush.bf16.msra.mxu0 %v1840
    %1862 = vmatpush.bf16.msra.mxu0 %v1839
    %1863 = vmatmul.bf16.gmra.mxu0 %v1786
    %v1864 = vpop.f32.mrf.mxu0
    %v1865 = vadd.f32 %v1805, %v1864
    %v1866 = vpop.f32.mrf.mxu0
    %1867 = vdwg.mxu0
    %v1868 = vmax.f32 %v1865, 0.0
    %v1869 = vpack.c.bf16 %v1868, %v1868
    %v1870 = vld [vmem:[#allocation10] sm:$0xf]
    %v1871 = vld [vmem:[#allocation10 + $0x4] sm:$0xf]
    %v1872 = vld [vmem:[#allocation10 + $0x8] sm:$0xf]
    %v1873 = vld [vmem:[#allocation10 + $0xc] sm:$0xf]
    %v1874 = vld [vmem:[#allocation10 + $0x10] sm:$0xf]
    %v1875 = vld [vmem:[#allocation10 + $0x14] sm:$0xf]
    %v1876 = vld [vmem:[#allocation10 + $0x18] sm:$0xf]
    %v1877 = vld [vmem:[#allocation10 + $0x1c] sm:$0xf]
    %v1878 = vld [vmem:[#allocation10 + $0x20] sm:$0xf]
    %v1879 = vld [vmem:[#allocation10 + $0x24] sm:$0xf]
    %v1880 = vld [vmem:[#allocation10 + $0x28] sm:$0xf]
    %v1881 = vld [vmem:[#allocation10 + $0x2c] sm:$0xf]
    %v1882 = vld [vmem:[#allocation10 + $0x30] sm:$0xf]
    %v1883 = vld [vmem:[#allocation10 + $0x34] sm:$0xf]
    %v1884 = vld [vmem:[#allocation10 + $0x38] sm:$0xf]
    %v1885 = vld [vmem:[#allocation10 + $0x3c] sm:$0xf]
    %v1886 = vld [vmem:[%s10] sm:$0x1]
    %v1888 = vperm.slane %v1886, 0
    %v1906 = vunpack.c.l.b16 %v1870
    %v1907 = vunpack.c.l.b16 %v1871
    %v1908 = vunpack.c.l.b16 %v1872
    %v1909 = vunpack.c.l.b16 %v1873
    %v1910 = vunpack.c.l.b16 %v1874
    %v1911 = vunpack.c.l.b16 %v1875
    %v1912 = vunpack.c.l.b16 %v1876
    %v1913 = vunpack.c.l.b16 %v1877
    %v1914 = vunpack.c.l.b16 %v1878
    %v1915 = vunpack.c.l.b16 %v1879
    %v1916 = vunpack.c.l.b16 %v1880
    %v1917 = vunpack.c.l.b16 %v1881
    %v1918 = vunpack.c.l.b16 %v1882
    %v1919 = vunpack.c.l.b16 %v1883
    %v1920 = vunpack.c.l.b16 %v1884
    %v1921 = vunpack.c.l.b16 %v1885
    %v1922 = vpack.c.b16 %v1907, %v1906
    %v1923 = vpack.c.b16 %v1909, %v1908
    %v1924 = vpack.c.b16 %v1911, %v1910
    %v1925 = vpack.c.b16 %v1913, %v1912
    %v1926 = vpack.c.b16 %v1915, %v1914
    %v1927 = vpack.c.b16 %v1917, %v1916
    %v1928 = vpack.c.b16 %v1919, %v1918
    %v1929 = vpack.c.b16 %v1921, %v1920
    %1938 = vmatpush.bf16.msra.mxu0 %v1929
    %1939 = vmatpush.bf16.msra.mxu0 %v1928
    %1940 = vmatpush.bf16.msra.mxu0 %v1927
    %1941 = vmatpush.bf16.msra.mxu0 %v1926
    %1942 = vmatpush.bf16.msra.mxu0 %v1925
    %1943 = vmatpush.bf16.msra.mxu0 %v1924
    %1944 = vmatpush.bf16.msra.mxu0 %v1923
    %1945 = vmatpush.bf16.msra.mxu0 %v1922
    %1946 = vmatmul.bf16.gmra.mxu0 %v1869
    %v1947 = vpop.f32.mrf.mxu0
    %v1948 = vadd.f32 %v1888, %v1947
    %v1949 = vpop.f32.mrf.mxu0
    %1950 = vdwg.mxu0
    %1951 = vst [vmem:[#allocation11] sm:$0xff] %v1948
    // Predicated region
    $region66: #{pytorch_classification_5_forward.1} parent=1 // pred_check
      _
    $region67: #{pytorch_classification_5_forward.1} parent=1 // pred_check_branch
      %1953 = sbr.rel (0) target = $region69
    $region68: #{pytorch_classification_5_forward.1} parent=1 // pred_region
      %1955 = vsyncadd [#allocation4], 0
      %s1957 = sshll.u32 [#allocation11], 4
      %s1958 = int_to_ptr.vmem [resolvable:$true] %s1957
      %s1959 = sshll.u32 %s11, 4
      %s1960 = int_to_ptr.hbm [resolvable:$true] %s1959
      %1962 = dma.vmem_to_hbm [thread:$0]  %s1958, 128, %s1960, [#allocation4]
    $region69: #{pytorch_classification_5_forward.1} parent=1 // pred_fallthru
      _
    // Predicated region
    $region70: #{pytorch_classification_5_forward.1} parent=1 // pred_check
      _
    $region71: #{pytorch_classification_5_forward.1} parent=1 // pred_check_branch
      %1964 = sbr.rel (0) target = $region73
    $region72: #{pytorch_classification_5_forward.1} parent=1 // pred_region
      %1966 = dma.done [#allocation4], 128
    $region73: #{pytorch_classification_5_forward.1} parent=1 // pred_fallthru
      _
    %1967 = vsyncpa [#allocation3], 1
    %1968 = vsyncpa [#allocation6], 1
    %1969 = vsyncpa [#allocation9], 1
    %1970 = vsyncpa [#allocation4], 1

</llo_original>
